<compile_context>
chip_gen: v7x
topology: tpu7x:2x2x1
jax: 0.10.0
libtpu: 0.0.40
codegen_flags: <defaults>
</compile_context>

<pallas_src>
import jax
import jax.numpy as jnp
from jax.experimental import pallas as pl
from jax.experimental.pallas import tpu as pltpu


def _round_up(x, m):
    return ((x + m - 1) // m) * m


# ---------------------------------------------------------------------------
# Kernel 1: one RGCN layer for ALL metapaths.
#   grid = (P, dst_tiles, src_tiles)   -- ("parallel", "parallel", "arbitrary")
#   x is resident per metapath (full (1, Np, Fp) block); A tiles stream as int8.
#   acc[dst_tile] += A01[p, dst_tile, src_tile] @ x[p, src_tile]   (bf16 -> f32)
#   last src tile:  out = relu( (acc * 1/deg) @ W_msg + x_dst @ W_root + b )
# ---------------------------------------------------------------------------
def _rgcn_layer_kernel(x_ref, a_ref, invdeg_ref, wmsg_ref, wroot_ref, b_ref,
                       o_ref, acc_ref):
    d = pl.program_id(1)
    s = pl.program_id(2)
    tile = acc_ref.shape[0]

    @pl.when(s == 0)
    def _():
        acc_ref[...] = jnp.zeros_like(acc_ref)

    # h += A01_tile @ x_src_tile  (int8 counts -> bf16 exactly, f32 accumulation)
    src0 = pl.multiple_of(s * tile, tile)
    x_src = x_ref[0, pl.ds(src0, tile), :]              # (tile, Fp) bf16, resident
    a_blk = a_ref[0].astype(jnp.bfloat16)               # (tile, tile)
    acc_ref[...] += jnp.dot(a_blk, x_src, preferred_element_type=jnp.float32)

    @pl.when(s == pl.num_programs(2) - 1)
    def _():
        # Exact mean aggregation: f32 1/deg row scale on the f32 accumulator.
        h = (acc_ref[...] * invdeg_ref[0]).astype(jnp.bfloat16)   # (tile, Fp)
        dst0 = pl.multiple_of(d * tile, tile)
        x_dst = x_ref[0, pl.ds(dst0, tile), :]                    # (tile, Fp) bf16
        out = (jnp.dot(h, wmsg_ref[0], preferred_element_type=jnp.float32)
               + jnp.dot(x_dst, wroot_ref[0], preferred_element_type=jnp.float32)
               + b_ref[0])
        # Padded dst rows become relu(b); they are never read back as real rows
        # (their A columns are zero and the final output is cropped to nreg).
        o_ref[0] = jnp.maximum(out, 0.0).astype(o_ref.dtype)


def rgcn_layer(x, a_i8, invdeg, w_msg, w_root, b, *, tile):
    """x: (P,Np,Fp) bf16; a: (P,Np,Np) int8 counts; invdeg: (P,Np,1) f32;
    w_msg/w_root: (P,Fp,Fp) bf16; b: (P,1,Fp) f32.  Returns (P,Np,Fp) bf16."""
    P, n_pad, fp = x.shape
    assert n_pad % tile == 0
    n_tiles = n_pad // tile
    grid = (P, n_tiles, n_tiles)

    a_map = lambda p, d, s: (p, d, s)
    if tile <= 256 and n_tiles >= 3:
        # Small tiles under-amortize DMA issue latency -> deepen the A pipeline.
        a_spec = pl.BlockSpec((1, tile, tile), a_map, pipeline_mode=pl.Buffered(3))
    else:
        a_spec = pl.BlockSpec((1, tile, tile), a_map)

    flops = P * (2 * n_pad * n_pad * fp + 4 * n_pad * fp * fp)
    bytes_acc = (a_i8.size                       # int8 adjacency stream
                 + x.size * 2                    # bf16 x, read once per metapath
                 + invdeg.size * 4
                 + (w_msg.size + w_root.size) * 2
                 + b.size * 4
                 + P * n_pad * fp * 2)           # bf16 output

    return pl.pallas_call(
        _rgcn_layer_kernel,
        out_shape=jax.ShapeDtypeStruct((P, n_pad, fp), jnp.bfloat16),
        grid_spec=pltpu.PrefetchScalarGridSpec(
            num_scalar_prefetch=0,
            grid=grid,
            in_specs=[
                pl.BlockSpec((1, n_pad, fp), lambda p, d, s: (p, 0, 0)),   # x resident
                a_spec,                                                    # A01 tile (int8)
                pl.BlockSpec((1, tile, 1), lambda p, d, s: (p, d, 0)),     # 1/deg rows
                pl.BlockSpec((1, fp, fp), lambda p, d, s: (p, 0, 0)),      # W_msg
                pl.BlockSpec((1, fp, fp), lambda p, d, s: (p, 0, 0)),      # W_root
                pl.BlockSpec((1, 1, fp), lambda p, d, s: (p, 0, 0)),       # bias
            ],
            out_specs=pl.BlockSpec((1, tile, fp), lambda p, d, s: (p, d, 0)),
            scratch_shapes=[pltpu.VMEM((tile, fp), jnp.float32)],
        ),
        compiler_params=pltpu.CompilerParams(
            dimension_semantics=("parallel", "parallel", "arbitrary"),
            vmem_limit_bytes=32 * 1024 * 1024,
        ),
        cost_estimate=pl.CostEstimate(
            flops=int(flops), transcendentals=0, bytes_accessed=int(bytes_acc)
        ),
    )(x, a_i8, invdeg, w_msg, w_root, b)


# ---------------------------------------------------------------------------
# Kernel 2a: metapath weights = softmax_P( Linear(tanh(Linear(mp_emb))) ).
# Runs ONCE (no grid) -- hoisted out of the per-row-tile attention body.
# ---------------------------------------------------------------------------
def _metapath_weight_kernel(mp_ref, w1_ref, b1_ref, w2_ref, w_ref):
    h = jnp.tanh(
        jnp.dot(mp_ref[...], w1_ref[...], preferred_element_type=jnp.float32)
        + b1_ref[...]
    )                                                            # (P, Fp)
    logits = jnp.sum(h * w2_ref[...], axis=-1, keepdims=True)    # (P, 1)
    m = jnp.max(logits, axis=0, keepdims=True)
    e = jnp.exp(logits - m)
    w_ref[...] = e / jnp.sum(e, axis=0, keepdims=True)           # exact softmax


def metapath_weights(mp, w1, b1, w2):
    """mp: (P,Dp) f32; w1: (Dp,Fp); b1: (1,Fp); w2: (1,Fp).  Returns (P,1) f32."""
    P = mp.shape[0]
    return pl.pallas_call(
        _metapath_weight_kernel,
        out_shape=jax.ShapeDtypeStruct((P, 1), jnp.float32),
    )(mp, w1, b1, w2)


# ---------------------------------------------------------------------------
# Kernel 2b: weighted sum over metapaths (pure bandwidth on emb).
#   out[r_tile] = sum_P weights[p] * emb[p, r_tile]
# ---------------------------------------------------------------------------
def _weighted_sum_kernel(w_ref, emb_ref, o_ref):
    w = w_ref[...]                                   # (P, 1) f32
    e = emb_ref[...].astype(jnp.float32)             # (P, tile_r, Fp)
    o_ref[...] = jnp.sum(e * w[:, :, None], axis=0)


def weighted_sum(emb, w, *, tile_r):
    """emb: (P, nreg_pad, Fp) bf16; w: (P,1) f32.  Returns (nreg_pad, Fp) f32."""
    P, nreg_pad, fp = emb.shape
    assert nreg_pad % tile_r == 0
    grid = (nreg_pad // tile_r,)

    flops = 2 * P * nreg_pad * fp
    bytes_acc = emb.size * 2 + w.size * 4 + nreg_pad * fp * 4

    return pl.pallas_call(
        _weighted_sum_kernel,
        out_shape=jax.ShapeDtypeStruct((nreg_pad, fp), jnp.float32),
        grid_spec=pltpu.PrefetchScalarGridSpec(
            num_scalar_prefetch=0,
            grid=grid,
            in_specs=[
                pl.BlockSpec((P, 1), lambda r: (0, 0)),
                pl.BlockSpec((P, tile_r, fp), lambda r: (0, r, 0)),
            ],
            out_specs=pl.BlockSpec((tile_r, fp), lambda r: (r, 0)),
        ),
        compiler_params=pltpu.CompilerParams(
            dimension_semantics=("parallel",),
            vmem_limit_bytes=32 * 1024 * 1024,
        ),
        cost_estimate=pl.CostEstimate(
            flops=int(flops), transcendentals=0, bytes_accessed=int(bytes_acc)
        ),
    )(w, emb)


# ---------------------------------------------------------------------------
# Glue: dense unnormalized adjacency (edge counts, src -> dst) + 1/deg rows.
# Matches PyG scatter-mean:  mean_j x_j = (1/deg_dst) * sum_edges x_src.
# ---------------------------------------------------------------------------
def dense_adj_and_invdeg(edge_index, n):
    src, dst = edge_index[0], edge_index[1]
    cnt = jnp.zeros((n, n), jnp.float32).at[dst, src].add(1.0)
    deg = jnp.sum(cnt, axis=1, keepdims=True)
    invdeg = 1.0 / jnp.maximum(deg, 1.0)
    return cnt, invdeg


# ---------------------------------------------------------------------------
# HANLayer forward: host-side padding/packing + the Pallas kernels.
# ---------------------------------------------------------------------------
def han_layer_forward(gs, E, metapath_emb, params, *, sub_layer, nreg, out_size,
                      tile_n=512):
    P = len(gs)
    in_size = E.shape[1]
    d_emb = metapath_emb.shape[1]

    fp = _round_up(max(in_size, out_size), 128)        # lane-dense feature dim
    dp = _round_up(d_emb, 128)
    n_max = max(int(eids.shape[0]) for _, eids in gs)
    n128 = _round_up(n_max, 128)
    tile_n = _round_up(tile_n, 128)
    tile = min(1024 if n128 >= 4096 else tile_n, n128)  # big tiles amortize overhead
    np_pad = _round_up(n_max, tile)

    # --- per-metapath features (bf16), 0/1 adjacency counts (int8), 1/deg (f32) ---
    xs, adjs, invdegs = [], [], []
    for edge_index, eids in gs:
        n = int(eids.shape[0])
        xs.append(jnp.pad(E[eids], ((0, np_pad - n), (0, fp - in_size))))
        cnt, inv = dense_adj_and_invdeg(edge_index, n)
        adjs.append(jnp.pad(cnt, ((0, np_pad - n), (0, np_pad - n))))
        invdegs.append(jnp.pad(inv, ((0, np_pad - n), (0, 0))))
    x = jnp.stack(xs, axis=0).astype(jnp.bfloat16)        # (P, Np, Fp) bf16
    a = jnp.stack(adjs, axis=0).astype(jnp.int8)          # (P, Np, Np) int8 counts
    invdeg = jnp.stack(invdegs, axis=0)                   # (P, Np, 1)  f32

    # --- per-layer projection weights (relation 0 of the bank) and biases ---
    wmsgs, wroots, biases = [], [], []
    for j in range(sub_layer):
        wm_j, wr_j, b_j = [], [], []
        for i in range(P):
            pij = params["gnn"][i][j]
            wm_j.append(jnp.pad(pij["w_msg"],
                                ((0, fp - pij["w_msg"].shape[0]),
                                 (0, fp - pij["w_msg"].shape[1]))))
            wr_j.append(jnp.pad(pij["w_root"],
                                ((0, fp - pij["w_root"].shape[0]),
                                 (0, fp - pij["w_root"].shape[1]))))
            b_j.append(jnp.pad(pij["b"], ((0, 0), (0, fp - pij["b"].shape[1]))))
        wmsgs.append(jnp.stack(wm_j, axis=0).astype(jnp.bfloat16))   # (P, Fp, Fp)
        wroots.append(jnp.stack(wr_j, axis=0).astype(jnp.bfloat16))  # (P, Fp, Fp)
        biases.append(jnp.stack(b_j, axis=0))                        # (P, 1, Fp) f32

    # --- sub-layers: x <- relu((1/deg)*(A01 @ x) @ W_msg + x @ W_root + b) ---
    for j in range(sub_layer):
        x = rgcn_layer(x, a, invdeg, wmsgs[j], wroots[j], biases[j], tile=tile)

    # --- semantic attention over metapaths ---
    tile_r = min(256, _round_up(nreg, 8))
    nreg_pad = _round_up(nreg, tile_r)
    emb = jnp.pad(x[:, :nreg, :], ((0, 0), (0, nreg_pad - nreg), (0, 0)))  # bf16

    w1 = jnp.pad(params["w1"], ((0, dp - d_emb), (0, fp - out_size)))
    b1 = jnp.pad(params["b1"], ((0, 0), (0, fp - out_size)))
    w2 = jnp.pad(params["w2"], ((0, fp - out_size), (0, 0))).T             # (1, Fp)
    mp = jnp.pad(metapath_emb, ((0, 0), (0, dp - d_emb)))

    w = metapath_weights(mp, w1, b1, w2)                                   # (P, 1)
    out = weighted_sum(emb, w, tile_r=tile_r)                              # (nreg_pad, Fp)
    return out[:nreg, :out_size]


# ---------------------------------------------------------------------------
# Deterministic parameter / input construction + demo.
# ---------------------------------------------------------------------------
def _xavier_normal(key, shape):
    fan_in, fan_out = shape[-2], shape[-1]
    std = (2.0 / (fan_in + fan_out)) ** 0.5
    return std * jax.random.normal(key, shape, jnp.float32)


if __name__ == "__main__":
    # Small shapes consistent with the module's forward.
    num_meta_paths = 2          # P
    in_size = 16
    out_size = 16
    d_emb = 16                  # d.metapath_emb.shape[1]
    nreg = 8
    sub_layer = 2
    nrs = [3, 2]                # relations per metapath (only relation 0 used)
    n_nodes = 32                # nodes per metapath graph (= len(eids))
    n_edges = 64
    n_E = 48                    # total edge-feature table rows

    key = jax.random.PRNGKey(0)
    keys = list(jax.random.split(key, 64))
    kit = iter(keys)

    # Parameters (deterministic synthetic init; shapes follow RGCNConv + project).
    gnn_params = []
    for i in range(num_meta_paths):
        layers = []
        for j in range(sub_layer):
            fin = in_size
            fout = in_size if j < sub_layer - 1 else out_size
            w_bank = _xavier_normal(next(kit), (nrs[i], fin, fout))     # relation bank
            layers.append(
                dict(
                    w_msg=w_bank[0],                                    # relation 0
                    w_root=_xavier_normal(next(kit), (fin, fout)),
                    b=jnp.zeros((1, fout), jnp.float32),
                )
            )
        gnn_params.append(layers)

    params = dict(
        gnn=gnn_params,
        w1=_xavier_normal(next(kit), (d_emb, out_size)),                # Linear(d_emb, out)
        b1=jnp.zeros((1, out_size), jnp.float32),
        w2=_xavier_normal(next(kit), (out_size, 1)),                    # Linear(out, 1, no bias)
    )

    # Inputs: E (edge-feature table), metapath embeddings, graphs (edge_index, eids).
    E = jax.random.normal(next(kit), (n_E, in_size), jnp.float32)
    metapath_emb = jax.random.normal(next(kit), (num_meta_paths, d_emb), jnp.float32)

    gs = []
    for i in range(num_meta_paths):
        edge_index = jax.random.randint(next(kit), (2, n_edges), 0, n_nodes)
        eids = jax.random.permutation(next(kit), n_E)[:n_nodes]
        gs.append((edge_index, eids))

    out = han_layer_forward(
        gs, E, metapath_emb, params,
        sub_layer=sub_layer, nreg=nreg, out_size=out_size,
    )
    out = jax.block_until_ready(out)
    assert out.shape == (nreg, out_size), out.shape
    assert bool(jnp.all(jnp.isfinite(out)))
    print("KERNEL_OK")
</pallas_src>

<mosaic_0001>
module attributes {stable_mosaic.version = 11 : i64} {
  func.func @_rgcn_layer_kernel(%arg0: i32, %arg1: i32, %arg2: i32, %arg3: memref<1x128x128xbf16, #tpu.memory_space<vmem>>, %arg4: memref<1x128x128xi8, #tpu.memory_space<vmem>>, %arg5: memref<1x128x1xf32, #tpu.memory_space<vmem>>, %arg6: memref<1x128x128xbf16, #tpu.memory_space<vmem>>, %arg7: memref<1x128x128xbf16, #tpu.memory_space<vmem>>, %arg8: memref<1x1x128xf32, #tpu.memory_space<vmem>>, %arg9: memref<1x128x128xbf16, #tpu.memory_space<vmem>>, %arg10: memref<128x128xf32, #tpu.memory_space<vmem>>) attributes {dimension_semantics = [#tpu.dimension_semantics<parallel>, #tpu.dimension_semantics<parallel>, #tpu.dimension_semantics<arbitrary>], iteration_bounds = array<i64: 2, 1, 1>, scalar_prefetch = 0 : i64, scratch_operands = 1 : i64, tpu.core_type = #tpu.core_type<tc>, window_params = [{transform_indices = @transform_0, window_bounds = array<i64: 1, 128, 128>}, {transform_indices = @transform_1, window_bounds = array<i64: 1, 128, 128>}, {transform_indices = @transform_2, window_bounds = array<i64: 1, 128, 1>}, {transform_indices = @transform_3, window_bounds = array<i64: 1, 128, 128>}, {transform_indices = @transform_4, window_bounds = array<i64: 1, 128, 128>}, {transform_indices = @transform_5, window_bounds = array<i64: 1, 1, 128>}, {transform_indices = @transform_6, window_bounds = array<i64: 1, 128, 128>}]} {
    %c0_i32 = arith.constant 0 : i32
    %0 = arith.cmpi eq, %arg2, %c0_i32 : i32
    %1 = arith.extui %0 : i1 to i32
    %c0_i32_0 = arith.constant 0 : i32
    %2 = arith.cmpi ne, %1, %c0_i32_0 : i32
    scf.if %2 {
      %cst_11 = arith.constant 0.000000e+00 : f32
      %18 = vector.broadcast %cst_11 : f32 to vector<128x128xf32>
      %c0_12 = arith.constant 0 : index
      %c0_13 = arith.constant 0 : index
      %19 = vector.load %arg10[%c0_12, %c0_13] : memref<128x128xf32, #tpu.memory_space<vmem>>, vector<128x128xf32>
      tpu.vector_store %arg10[%c0_12, %c0_13], %18 {strides = array<i32>} : memref<128x128xf32, #tpu.memory_space<vmem>>, vector<128x128xf32>,
    } else {
    }
    %c128_i32 = arith.constant 128 : i32
    %3 = arith.muli %arg2, %c128_i32 : i32
    %4 = tpu.assume_multiple %3, 128 : i32
    %c0 = arith.constant 0 : index
    %5 = arith.index_cast %4 : i32 to index
    %c0_1 = arith.constant 0 : index
    %6 = vector.load %arg3[%c0, %5, %c0_1] : memref<1x128x128xbf16, #tpu.memory_space<vmem>>, vector<1x128x128xbf16>
    %7 = vector.shape_cast %6 : vector<1x128x128xbf16> to vector<128x128xbf16>
    %c0_2 = arith.constant 0 : index
    %c0_3 = arith.constant 0 : index
    %c0_4 = arith.constant 0 : index
    %8 = vector.load %arg4[%c0_2, %c0_3, %c0_4] : memref<1x128x128xi8, #tpu.memory_space<vmem>>, vector<1x128x128xi8>
    %9 = vector.shape_cast %8 : vector<1x128x128xi8> to vector<128x128xi8>
    %10 = arith.sitofp %9 : vector<128x128xi8> to vector<128x128xbf16>
    %c0_5 = arith.constant 0 : index
    %c0_6 = arith.constant 0 : index
    %11 = vector.load %arg10[%c0_5, %c0_6] : memref<128x128xf32, #tpu.memory_space<vmem>>, vector<128x128xf32>
    %cst = arith.constant dense<0.000000e+00> : vector<128x128xf32>
    %12 = tpu.matmul %10, %7, %cst {dimension_numbers = #tpu.dot_dimension_numbers<[1], [0], [0], [1], [0, 0, 1, 1], [], []>} : vector<128x128xbf16>, vector<128x128xbf16>, vector<128x128xf32> -> vector<128x128xf32>
    %13 = arith.addf %11, %12 : vector<128x128xf32>
    %c0_7 = arith.constant 0 : index
    %c0_8 = arith.constant 0 : index
    %14 = vector.load %arg10[%c0_7, %c0_8] : memref<128x128xf32, #tpu.memory_space<vmem>>, vector<128x128xf32>
    tpu.vector_store %arg10[%c0_7, %c0_8], %13 {strides = array<i32>} : memref<128x128xf32, #tpu.memory_space<vmem>>, vector<128x128xf32>,
    %c0_i32_9 = arith.constant 0 : i32
    %15 = arith.cmpi eq, %arg2, %c0_i32_9 : i32
    %16 = arith.extui %15 : i1 to i32
    %c0_i32_10 = arith.constant 0 : i32
    %17 = arith.cmpi ne, %16, %c0_i32_10 : i32
    scf.if %17 {
      %c0_11 = arith.constant 0 : index
      %c0_12 = arith.constant 0 : index
      %18 = vector.load %arg10[%c0_11, %c0_12] : memref<128x128xf32, #tpu.memory_space<vmem>>, vector<128x128xf32>
      %c0_13 = arith.constant 0 : index
      %c0_14 = arith.constant 0 : index
      %c0_15 = arith.constant 0 : index
      %19 = vector.load %arg5[%c0_13, %c0_14, %c0_15] : memref<1x128x1xf32, #tpu.memory_space<vmem>>, vector<1x128x1xf32>
      %20 = vector.shape_cast %19 : vector<1x128x1xf32> to vector<128x1xf32>
      %21 = vector.broadcast %20 : vector<128x1xf32> to vector<128x128xf32>
      %22 = arith.mulf %18, %21 : vector<128x128xf32>
      %23 = arith.truncf %22 : vector<128x128xf32> to vector<128x128xbf16>
      %c128_i32_16 = arith.constant 128 : i32
      %24 = arith.muli %arg1, %c128_i32_16 : i32
      %25 = tpu.assume_multiple %24, 128 : i32
      %c0_17 = arith.constant 0 : index
      %26 = arith.index_cast %25 : i32 to index
      %c0_18 = arith.constant 0 : index
      %27 = vector.load %arg3[%c0_17, %26, %c0_18] : memref<1x128x128xbf16, #tpu.memory_space<vmem>>, vector<1x128x128xbf16>
      %28 = vector.shape_cast %27 : vector<1x128x128xbf16> to vector<128x128xbf16>
      %c0_19 = arith.constant 0 : index
      %c0_20 = arith.constant 0 : index
      %c0_21 = arith.constant 0 : index
      %29 = vector.load %arg6[%c0_19, %c0_20, %c0_21] : memref<1x128x128xbf16, #tpu.memory_space<vmem>>, vector<1x128x128xbf16>
      %30 = vector.shape_cast %29 : vector<1x128x128xbf16> to vector<128x128xbf16>
      %cst_22 = arith.constant dense<0.000000e+00> : vector<128x128xf32>
      %31 = tpu.matmul %23, %30, %cst_22 {dimension_numbers = #tpu.dot_dimension_numbers<[1], [0], [0], [1], [0, 0, 1, 1], [], []>} : vector<128x128xbf16>, vector<128x128xbf16>, vector<128x128xf32> -> vector<128x128xf32>
      %c0_23 = arith.constant 0 : index
      %c0_24 = arith.constant 0 : index
      %c0_25 = arith.constant 0 : index
      %32 = vector.load %arg7[%c0_23, %c0_24, %c0_25] : memref<1x128x128xbf16, #tpu.memory_space<vmem>>, vector<1x128x128xbf16>
      %33 = vector.shape_cast %32 : vector<1x128x128xbf16> to vector<128x128xbf16>
      %cst_26 = arith.constant dense<0.000000e+00> : vector<128x128xf32>
      %34 = tpu.matmul %28, %33, %cst_26 {dimension_numbers = #tpu.dot_dimension_numbers<[1], [0], [0], [1], [0, 0, 1, 1], [], []>} : vector<128x128xbf16>, vector<128x128xbf16>, vector<128x128xf32> -> vector<128x128xf32>
      %35 = arith.addf %31, %34 : vector<128x128xf32>
      %c0_27 = arith.constant 0 : index
      %c0_28 = arith.constant 0 : index
      %c0_29 = arith.constant 0 : index
      %36 = vector.load %arg8[%c0_27, %c0_28, %c0_29] : memref<1x1x128xf32, #tpu.memory_space<vmem>>, vector<1x1x128xf32>
      %37 = vector.shape_cast %36 : vector<1x1x128xf32> to vector<1x128xf32>
      %38 = vector.broadcast %37 : vector<1x128xf32> to vector<128x128xf32>
      %39 = arith.addf %35, %38 : vector<128x128xf32>
      %cst_30 = arith.constant 0.000000e+00 : f32
      %40 = vector.broadcast %cst_30 : f32 to vector<128x128xf32>
      %41 = arith.maximumf %39, %40 : vector<128x128xf32>
      %42 = arith.truncf %41 : vector<128x128xf32> to vector<128x128xbf16>
      %c0_31 = arith.constant 0 : index
      %c0_32 = arith.constant 0 : index
      %c0_33 = arith.constant 0 : index
      %43 = vector.load %arg9[%c0_31, %c0_32, %c0_33] : memref<1x128x128xbf16, #tpu.memory_space<vmem>>, vector<1x128x128xbf16>
      %44 = vector.shape_cast %43 : vector<1x128x128xbf16> to vector<128x128xbf16>
      %45 = vector.shape_cast %42 : vector<128x128xbf16> to vector<1x128x128xbf16>
      tpu.vector_store %arg9[%c0_31, %c0_32, %c0_33], %45 {strides = array<i32>} : memref<1x128x128xbf16, #tpu.memory_space<vmem>>, vector<1x128x128xbf16>,
    } else {
    }
    return
  }
  func.func @transform_0(%arg0: i32, %arg1: i32, %arg2: i32) -> (i32, i32, i32) {
    %c0_i32 = arith.constant 0 : i32
    %c0_i32_0 = arith.constant 0 : i32
    %c0_i32_1 = arith.constant 0 : i32
    return %arg0, %c0_i32, %c0_i32_0 : i32, i32, i32
  }
  func.func @transform_1(%arg0: i32, %arg1: i32, %arg2: i32) -> (i32, i32, i32) {
    %c0_i32 = arith.constant 0 : i32
    return %arg0, %arg1, %arg2 : i32, i32, i32
  }
  func.func @transform_2(%arg0: i32, %arg1: i32, %arg2: i32) -> (i32, i32, i32) {
    %c0_i32 = arith.constant 0 : i32
    %c0_i32_0 = arith.constant 0 : i32
    return %arg0, %arg1, %c0_i32 : i32, i32, i32
  }
  func.func @transform_3(%arg0: i32, %arg1: i32, %arg2: i32) -> (i32, i32, i32) {
    %c0_i32 = arith.constant 0 : i32
    %c0_i32_0 = arith.constant 0 : i32
    %c0_i32_1 = arith.constant 0 : i32
    return %arg0, %c0_i32, %c0_i32_0 : i32, i32, i32
  }
  func.func @transform_4(%arg0: i32, %arg1: i32, %arg2: i32) -> (i32, i32, i32) {
    %c0_i32 = arith.constant 0 : i32
    %c0_i32_0 = arith.constant 0 : i32
    %c0_i32_1 = arith.constant 0 : i32
    return %arg0, %c0_i32, %c0_i32_0 : i32, i32, i32
  }
  func.func @transform_5(%arg0: i32, %arg1: i32, %arg2: i32) -> (i32, i32, i32) {
    %c0_i32 = arith.constant 0 : i32
    %c0_i32_0 = arith.constant 0 : i32
    %c0_i32_1 = arith.constant 0 : i32
    return %arg0, %c0_i32, %c0_i32_0 : i32, i32, i32
  }
  func.func @transform_6(%arg0: i32, %arg1: i32, %arg2: i32) -> (i32, i32, i32) {
    %c0_i32 = arith.constant 0 : i32
    %c0_i32_0 = arith.constant 0 : i32
    return %arg0, %arg1, %c0_i32 : i32, i32, i32
  }
}

</mosaic_0001>

<llo_original>
// kernel: tpu_custom_call.1
$region0: #{tpu_custom_call.1}
  #allocation0 [shape = 'u32[]', space=smem, size = 0x4, offset = 0x4, fixed_abs, tag = 'smem constant byte address 0x4 - core index']
  #allocation1 [shape = 'u32[144,128]{1,0:T(1,128)}', space=vmem, size = 0x12000, scoped, tag = 'internal scratch']
  #allocation2 [shape = 'f32[128,128]{1,0:T(8,128)}', space=vmem, size = 0x10000, scoped, tag = 'scratch operand']
  %s0 = inlined_call_operand.vmem [shape: bf16[2,128,128], index: 0, kind: input, shape index: {}]
  %s1 = inlined_call_operand.hbm [shape: s8[2,128,128], index: 1, kind: input, shape index: {}]
  %s2 = inlined_call_operand.vmem [shape: f32[2,128,1], index: 2, kind: input, shape index: {}]
  %s3 = inlined_call_operand.vmem [shape: bf16[2,128,128], index: 3, kind: input, shape index: {}]
  %s4 = inlined_call_operand.hbm [shape: bf16[2,128,128], index: 4, kind: input, shape index: {}]
  %s5 = inlined_call_operand.vmem [shape: f32[2,1,128], index: 5, kind: input, shape index: {}]
  %s6 = inlined_call_operand.hbm [shape: bf16[2,128,128], index: 6, kind: output, shape index: {}]
  %s7 = sld [smem:[#allocation0]]
  $region73: #{tpu_custom_call.1} parent=0
    _
  %s9 = ssub.s32 1, %s7
  %s10 = scalar_select 0, %s9, %s7
  $region1: #{tpu_custom_call.1} parent=0
    #allocation3 [shape = 'u8[32768]{0}', space=vmem, size = 0x8000, scoped, tag = 'input window, operand 1']
    #allocation4 [shape = 's32[2]{0}', space=sflag, size = 0x8, scoped, tag = 'scoped memory for tpu_custom_call.1']
    #allocation5 [shape = 's32[2]{0}', space=sflag, size = 0x8, scoped, tag = 'scoped memory for tpu_custom_call.1']
    #allocation6 [shape = 'u8[65536]{0}', space=vmem, size = 0x10000, scoped, tag = 'input window, operand 4']
    #allocation7 [shape = 's32[2]{0}', space=sflag, size = 0x8, scoped, tag = 'scoped memory for tpu_custom_call.1']
    #allocation8 [shape = 'u8[65536]{0}', space=vmem, size = 0x10000, scoped, tag = 'output window, operand 0']
    %11 = vsyncpa [#allocation4], 0
    %s12 = scalar_lea.sflag [#allocation4], 1
    %13 = vsyncpa %s12, 0
    %14 = vsyncpa [#allocation7], 0
    %s15 = scalar_lea.sflag [#allocation7], 1
    %16 = vsyncpa %s15, 0
    %17 = vsyncpa [#allocation5], 0
    %s18 = scalar_lea.sflag [#allocation5], 1
    %19 = vsyncpa %s18, 0
    loop: start=0, step=1, limit=4
    $region2: #{tpu_custom_call.1} parent=1 // loop_pre_header
      _
    $region3: #{tpu_custom_call.1} parent=1 // loop_header
      %s21 = sphi 0, %s25
      %p22 = scmp.ge.s32.totalorder %s21, 4
      %s28 = sphi 0, %s47
      %s29 = sphi 0, %s43
      %s30 = sphi 0, %s39
      %s31 = sphi 0, %s28
      %s32 = sphi 0, %s29
      %s33 = sphi 0, %s30
      %s34 = sphi 0, %s31
      %s35 = sphi 0, %s32
      %s36 = sphi 0, %s33
      %s50 = sphi 0, %s52
      %s53 = sphi 0, %s50
      %s54 = sphi 0, %s53
      %s70 = sphi 0, %s54
      %s80 = sphi 0, %s82
      %s83 = sphi 0, %s80
      %s84 = sphi 0, %s83
      %s100 = sphi 0, %s84
      %s108 = sphi 0, %s110
      %s111 = sphi 0, %s108
      %s112 = sphi 0, %s111
      %s128 = sphi 0, %s112
      %s134 = sphi 0, %s136
      %s137 = sphi 0, %s134
      %s138 = sphi 0, %s137
      %s154 = sphi 0, %s138
      %s160 = sphi 0, %s162
      %s163 = sphi 0, %s160
      %s164 = sphi 0, %s163
      %s180 = sphi 0, %s164
      %s186 = sphi 0, %s188
      %s189 = sphi 0, %s186
      %s190 = sphi 0, %s189
      %s206 = sphi 0, %s190
      %s214 = sphi 0, %s216
      %s217 = sphi 0, %s214
      %s218 = sphi 0, %s217
      %s234 = sphi 0, %s218
    $region4: #{tpu_custom_call.1} parent=1 // loop_header_branch
      %24 = sbr.rel (%p22) target = $region8
    $region5: #{tpu_custom_call.1} parent=1 // loop_body
      %s26 = ssub.s32 %s21, 1
      %s27 = ssub.s32 %s21, 2
      %s37 = sadd.s32 1, %s30
      %p38 = scmp.ge.s32.totalorder %s37, 1
      %s39 = scalar_select %p38, 0, %s37
      %s40 = sadd.s32 1, %s29
      %s41 = scalar_select %p38, %s40, %s29
      %p42 = scmp.ge.s32.totalorder %s41, 1
      %s43 = scalar_select %p42, 0, %s41
      %s44 = sadd.s32 1, %s28
      %s45 = scalar_select %p42, %s44, %s28
      %p46 = scmp.ge.s32.totalorder %s45, 2
      %s47 = scalar_select %p46, 0, %s45
      %s48 = ssub.s32 %s28, %s47
      %p49 = scmp.eq.s32.totalorder %s48, 0
      %s51 = sadd.s32 %s50, 1
      %s52 = scalar_select %p49, %s50, %s51
      %p55 = pneg %p49
      %p56 = scmp.eq.s32.totalorder %s21, 1
      %p57 = por %p55, %p56
      %p58 = scmp.ne.s32.totalorder %s50, %s53
      %p59 = scmp.eq.s32.totalorder %s21, 0
      %p60 = por %p58, %p59
      %p61 = scmp.ne.s32.totalorder %s50, %s53
      %p62 = scmp.eq.s32.totalorder %s26, 1
      %p63 = por %p61, %p62
      %p64 = scmp.ne.s32.totalorder %s53, %s54
      %p65 = scmp.eq.s32.totalorder %s26, 0
      %p66 = por %p64, %p65
      %p67 = scmp.ne.s32.totalorder %s53, %s54
      %p68 = scmp.eq.s32.totalorder %s27, 1
      %p69 = por %p67, %p68
      %p71 = scmp.ne.s32.totalorder %s54, %s70
      %p72 = scmp.eq.s32.totalorder %s27, 0
      %p73 = por %p71, %p72
      %s74 = ssub.s32 %s28, %s47
      %s75 = ssub.s32 %s29, %s43
      %s76 = sor.u32 %s74, %s75
      %s77 = ssub.s32 %s30, %s39
      %s78 = sor.u32 %s76, %s77
      %p79 = scmp.eq.s32.totalorder %s78, 0
      %s81 = sadd.s32 %s80, 1
      %s82 = scalar_select %p79, %s80, %s81
      %p85 = pneg %p79
      %p86 = scmp.eq.s32.totalorder %s21, 1
      %p87 = por %p85, %p86
      %p88 = scmp.ne.s32.totalorder %s80, %s83
      %p89 = scmp.eq.s32.totalorder %s21, 0
      %p90 = por %p88, %p89
      %p91 = scmp.ne.s32.totalorder %s80, %s83
      %p92 = scmp.eq.s32.totalorder %s26, 1
      %p93 = por %p91, %p92
      %p94 = scmp.ne.s32.totalorder %s83, %s84
      %p95 = scmp.eq.s32.totalorder %s26, 0
      %p96 = por %p94, %p95
      %p97 = scmp.ne.s32.totalorder %s83, %s84
      %p98 = scmp.eq.s32.totalorder %s27, 1
      %p99 = por %p97, %p98
      %p101 = scmp.ne.s32.totalorder %s84, %s100
      %p102 = scmp.eq.s32.totalorder %s27, 0
      %p103 = por %p101, %p102
      %s104 = ssub.s32 %s28, %s47
      %s105 = ssub.s32 %s29, %s43
      %s106 = sor.u32 %s104, %s105
      %p107 = scmp.eq.s32.totalorder %s106, 0
      %s109 = sadd.s32 %s108, 1
      %s110 = scalar_select %p107, %s108, %s109
      %p113 = pneg %p107
      %p114 = scmp.eq.s32.totalorder %s21, 1
      %p115 = por %p113, %p114
      %p116 = scmp.ne.s32.totalorder %s108, %s111
      %p117 = scmp.eq.s32.totalorder %s21, 0
      %p118 = por %p116, %p117
      %p119 = scmp.ne.s32.totalorder %s108, %s111
      %p120 = scmp.eq.s32.totalorder %s26, 1
      %p121 = por %p119, %p120
      %p122 = scmp.ne.s32.totalorder %s111, %s112
      %p123 = scmp.eq.s32.totalorder %s26, 0
      %p124 = por %p122, %p123
      %p125 = scmp.ne.s32.totalorder %s111, %s112
      %p126 = scmp.eq.s32.totalorder %s27, 1
      %p127 = por %p125, %p126
      %p129 = scmp.ne.s32.totalorder %s112, %s128
      %p130 = scmp.eq.s32.totalorder %s27, 0
      %p131 = por %p129, %p130
      %s132 = ssub.s32 %s28, %s47
      %p133 = scmp.eq.s32.totalorder %s132, 0
      %s135 = sadd.s32 %s134, 1
      %s136 = scalar_select %p133, %s134, %s135
      %p139 = pneg %p133
      %p140 = scmp.eq.s32.totalorder %s21, 1
      %p141 = por %p139, %p140
      %p142 = scmp.ne.s32.totalorder %s134, %s137
      %p143 = scmp.eq.s32.totalorder %s21, 0
      %p144 = por %p142, %p143
      %p145 = scmp.ne.s32.totalorder %s134, %s137
      %p146 = scmp.eq.s32.totalorder %s26, 1
      %p147 = por %p145, %p146
      %p148 = scmp.ne.s32.totalorder %s137, %s138
      %p149 = scmp.eq.s32.totalorder %s26, 0
      %p150 = por %p148, %p149
      %p151 = scmp.ne.s32.totalorder %s137, %s138
      %p152 = scmp.eq.s32.totalorder %s27, 1
      %p153 = por %p151, %p152
      %p155 = scmp.ne.s32.totalorder %s138, %s154
      %p156 = scmp.eq.s32.totalorder %s27, 0
      %p157 = por %p155, %p156
      %s158 = ssub.s32 %s28, %s47
      %p159 = scmp.eq.s32.totalorder %s158, 0
      %s161 = sadd.s32 %s160, 1
      %s162 = scalar_select %p159, %s160, %s161
      %p165 = pneg %p159
      %p166 = scmp.eq.s32.totalorder %s21, 1
      %p167 = por %p165, %p166
      %p168 = scmp.ne.s32.totalorder %s160, %s163
      %p169 = scmp.eq.s32.totalorder %s21, 0
      %p170 = por %p168, %p169
      %p171 = scmp.ne.s32.totalorder %s160, %s163
      %p172 = scmp.eq.s32.totalorder %s26, 1
      %p173 = por %p171, %p172
      %p174 = scmp.ne.s32.totalorder %s163, %s164
      %p175 = scmp.eq.s32.totalorder %s26, 0
      %p176 = por %p174, %p175
      %p177 = scmp.ne.s32.totalorder %s163, %s164
      %p178 = scmp.eq.s32.totalorder %s27, 1
      %p179 = por %p177, %p178
      %p181 = scmp.ne.s32.totalorder %s164, %s180
      %p182 = scmp.eq.s32.totalorder %s27, 0
      %p183 = por %p181, %p182
      %s184 = ssub.s32 %s28, %s47
      %p185 = scmp.eq.s32.totalorder %s184, 0
      %s187 = sadd.s32 %s186, 1
      %s188 = scalar_select %p185, %s186, %s187
      %p191 = pneg %p185
      %p192 = scmp.eq.s32.totalorder %s21, 1
      %p193 = por %p191, %p192
      %p194 = scmp.ne.s32.totalorder %s186, %s189
      %p195 = scmp.eq.s32.totalorder %s21, 0
      %p196 = por %p194, %p195
      %p197 = scmp.ne.s32.totalorder %s186, %s189
      %p198 = scmp.eq.s32.totalorder %s26, 1
      %p199 = por %p197, %p198
      %p200 = scmp.ne.s32.totalorder %s189, %s190
      %p201 = scmp.eq.s32.totalorder %s26, 0
      %p202 = por %p200, %p201
      %p203 = scmp.ne.s32.totalorder %s189, %s190
      %p204 = scmp.eq.s32.totalorder %s27, 1
      %p205 = por %p203, %p204
      %p207 = scmp.ne.s32.totalorder %s190, %s206
      %p208 = scmp.eq.s32.totalorder %s27, 0
      %p209 = por %p207, %p208
      %s210 = ssub.s32 %s28, %s47
      %s211 = ssub.s32 %s29, %s43
      %s212 = sor.u32 %s210, %s211
      %p213 = scmp.eq.s32.totalorder %s212, 0
      %s215 = sadd.s32 %s214, 1
      %s216 = scalar_select %p213, %s214, %s215
      %p219 = pneg %p213
      %p220 = scmp.eq.s32.totalorder %s21, 1
      %p221 = por %p219, %p220
      %p222 = scmp.ne.s32.totalorder %s214, %s217
      %p223 = scmp.eq.s32.totalorder %s21, 0
      %p224 = por %p222, %p223
      %p225 = scmp.ne.s32.totalorder %s214, %s217
      %p226 = scmp.eq.s32.totalorder %s26, 1
      %p227 = por %p225, %p226
      %p228 = scmp.ne.s32.totalorder %s217, %s218
      %p229 = scmp.eq.s32.totalorder %s26, 0
      %p230 = por %p228, %p229
      %p231 = scmp.ne.s32.totalorder %s217, %s218
      %p232 = scmp.eq.s32.totalorder %s27, 1
      %p233 = por %p231, %p232
      %p235 = scmp.ne.s32.totalorder %s218, %s234
      %p236 = scmp.eq.s32.totalorder %s27, 0
      %p237 = por %p235, %p236
      %p238 = scmp.le.s32.totalorder 1, %s21
      %p239 = scmp.lt.s32.totalorder %s21, 3
      %p240 = pnand %p238, %p239
      %p241 = pneg %p240
      // Predicated region
      $region9: #{tpu_custom_call.1} parent=5 // pred_check
        _
      $region10: #{tpu_custom_call.1} parent=5 // pred_check_branch
        %243 = sbr.rel (%p240) target = $region12
      $region11: #{tpu_custom_call.1} parent=5 // pred_region
        %s244 = ssub.s32 %s21, 1
      $region12: #{tpu_custom_call.1} parent=5 // pred_fallthru
        _
      %p245 = scmp.lt.s32.totalorder %s21, 2
      // Predicated region
      $region13: #{tpu_custom_call.1} parent=5 // pred_check
        %p246 = pneg %p245
      $region14: #{tpu_custom_call.1} parent=5 // pred_check_branch
        %248 = sbr.rel (%p246) target = $region16
      $region15: #{tpu_custom_call.1} parent=5 // pred_region
        // Predicated region
        $region17: #{tpu_custom_call.1} parent=15 // pred_check
          %p249 = pneg %p60
        $region18: #{tpu_custom_call.1} parent=15 // pred_check_branch
          %251 = sbr.rel (%p249) target = $region20
        $region19: #{tpu_custom_call.1} parent=15 // pred_region
          %p252 = scmp.lt.s32.totalorder %s28, 1
          %s253 = scalar_select %p252, %s28, 1
          %s254 = smul.addr %s253, 16
          %s255 = smul.addr %s254, 4
          %s256 = scalar_lea.vmem %s0, %s255
        $region20: #{tpu_custom_call.1} parent=15 // pred_fallthru
          _
        // Predicated region
        $region21: #{tpu_custom_call.1} parent=15 // pred_check
          %p257 = pneg %p90
        $region22: #{tpu_custom_call.1} parent=15 // pred_check_branch
          %259 = sbr.rel (%p257) target = $region24
        $region23: #{tpu_custom_call.1} parent=15 // pred_region
          %s260 = sand.u32 %s80, 1
          %s261 = scalar_lea.sflag [#allocation4], %s260
          %s262 = sand.u32 %s80, 1
          %s263 = smul.addr %s262, 32
          %s264 = scalar_lea.vmem [#allocation3], %s263
          %s265 = smul.u32 4, %s29
          %s267 = ssub.s32 512, 512
          %268 = vsyncadd %s261, %s267
          %s269 = sadd.s32 %s30, %s265
          %s270 = smul.addr %s28, 4
          %s271 = sadd.s32 %s269, %s270
          %s272 = smul.addr %s271, 128
          %s273 = scalar_lea.hbm %s1, %s272
          %s274 = sshll.u32 %s264, 4
          %s275 = int_to_ptr.vmem [resolvable:$true] %s274
          %280 = dma.hbm_to_vmem [thread:$0]  %s273, 512, %s275, %s261, 128, 128, 8
        $region24: #{tpu_custom_call.1} parent=15 // pred_fallthru
          _
        // Predicated region
        $region25: #{tpu_custom_call.1} parent=15 // pred_check
          %p281 = pneg %p118
        $region26: #{tpu_custom_call.1} parent=15 // pred_check_branch
          %283 = sbr.rel (%p281) target = $region28
        $region27: #{tpu_custom_call.1} parent=15 // pred_region
          %s284 = smul.u32 16, %s29
          %p285 = scmp.lt.s32.totalorder %s28, 1
          %s286 = scalar_select %p285, %s28, 1
          %p287 = scmp.lt.s32.totalorder %s284, 15
          %s288 = scalar_select %p287, %s284, 15
          %s289 = smul.addr %s286, 16
          %s290 = sadd.s32 %s288, %s289
          %s291 = smul.addr %s290, 8
          %s292 = scalar_lea.vmem %s2, %s291
          %s293 = smul.u32 16, %s29
        $region28: #{tpu_custom_call.1} parent=15 // pred_fallthru
          _
        // Predicated region
        $region29: #{tpu_custom_call.1} parent=15 // pred_check
          %p294 = pneg %p144
        $region30: #{tpu_custom_call.1} parent=15 // pred_check_branch
          %296 = sbr.rel (%p294) target = $region32
        $region31: #{tpu_custom_call.1} parent=15 // pred_region
          %p297 = scmp.lt.s32.totalorder %s28, 1
          %s298 = scalar_select %p297, %s28, 1
          %s299 = smul.addr %s298, 16
          %s300 = smul.addr %s299, 4
          %s301 = scalar_lea.vmem %s3, %s300
        $region32: #{tpu_custom_call.1} parent=15 // pred_fallthru
          _
        // Predicated region
        $region33: #{tpu_custom_call.1} parent=15 // pred_check
          %p302 = pneg %p170
        $region34: #{tpu_custom_call.1} parent=15 // pred_check_branch
          %304 = sbr.rel (%p302) target = $region36
        $region35: #{tpu_custom_call.1} parent=15 // pred_region
          %s305 = sand.u32 %s160, 1
          %s306 = scalar_lea.sflag [#allocation7], %s305
          %s307 = sand.u32 %s160, 1
          %s308 = smul.addr %s307, 64
          %s309 = scalar_lea.vmem [#allocation6], %s308
          %s311 = ssub.s32 1024, 1024
          %312 = vsyncadd %s306, %s311
          %s313 = smul.addr %s28, 16
          %s314 = smul.addr %s313, 64
          %s315 = scalar_lea.hbm %s4, %s314
          %s316 = sshll.u32 %s309, 4
          %s317 = int_to_ptr.vmem [resolvable:$true] %s316
          %322 = dma.hbm_to_vmem [thread:$0]  %s315, 1024, %s317, %s306, 64, 64, 4
        $region36: #{tpu_custom_call.1} parent=15 // pred_fallthru
          _
        // Predicated region
        $region37: #{tpu_custom_call.1} parent=15 // pred_check
          %p323 = pneg %p196
        $region38: #{tpu_custom_call.1} parent=15 // pred_check_branch
          %325 = sbr.rel (%p323) target = $region40
        $region39: #{tpu_custom_call.1} parent=15 // pred_region
          %p326 = scmp.lt.s32.totalorder %s28, 1
          %s327 = scalar_select %p326, %s28, 1
          %s328 = scalar_lea.vmem %s5, %s327
        $region40: #{tpu_custom_call.1} parent=15 // pred_fallthru
          _
      $region16: #{tpu_custom_call.1} parent=5 // pred_fallthru
        _
      %p329 = scmp.le.s32.totalorder 1, %s21
      %p330 = scmp.lt.s32.totalorder %s21, 3
      %p331 = pnand %p329, %p330
      %p332 = pneg %p331
      // Predicated region
      $region41: #{tpu_custom_call.1} parent=5 // pred_check
        _
      $region42: #{tpu_custom_call.1} parent=5 // pred_check_branch
        %334 = sbr.rel (%p331) target = $region44
      $region43: #{tpu_custom_call.1} parent=5 // pred_region
        %s335 = ssub.s32 %s21, 1
        %s336 = sand.u32 %s83, 1
        %s337 = scalar_lea.sflag [#allocation4], %s336
        %s338 = sand.u32 %s83, 1
        %s339 = smul.addr %s338, 32
        %s340 = scalar_lea.vmem [#allocation3], %s339
        // Predicated region
        $region45: #{tpu_custom_call.1} parent=43 // pred_check
          %p341 = pneg %p96
        $region46: #{tpu_custom_call.1} parent=43 // pred_check_branch
          %343 = sbr.rel (%p341) target = $region48
        $region47: #{tpu_custom_call.1} parent=43 // pred_region
          %344 = dma.done %s337, 512
        $region48: #{tpu_custom_call.1} parent=43 // pred_fallthru
          _
        %s345 = sand.u32 %s163, 1
        %s346 = scalar_lea.sflag [#allocation7], %s345
        %s347 = sand.u32 %s163, 1
        %s348 = smul.addr %s347, 64
        %s349 = scalar_lea.vmem [#allocation6], %s348
        // Predicated region
        $region49: #{tpu_custom_call.1} parent=43 // pred_check
          %p350 = pneg %p176
        $region50: #{tpu_custom_call.1} parent=43 // pred_check_branch
          %352 = sbr.rel (%p350) target = $region52
        $region51: #{tpu_custom_call.1} parent=43 // pred_region
          %353 = dma.done %s346, 1024
        $region52: #{tpu_custom_call.1} parent=43 // pred_fallthru
          _
        %p354 = scmp.lt.s32.totalorder %s31, 1
        %s355 = scalar_select %p354, %s31, 1
        %s356 = smul.addr %s355, 16
        %s357 = smul.addr %s356, 4
        %s358 = scalar_lea.vmem %s0, %s357
        %p359 = pneg %p66
        %p360 = pneg %p63
        %s361 = sand.u32 %s83, 1
        %s362 = scalar_lea.sflag [#allocation4], %s361
        %s363 = sand.u32 %s83, 1
        %s364 = smul.addr %s363, 32
        %s365 = scalar_lea.vmem [#allocation3], %s364
        %p366 = pneg %p96
        %p367 = pneg %p93
        %s368 = smul.u32 16, %s32
        %p369 = scmp.lt.s32.totalorder %s31, 1
        %s370 = scalar_select %p369, %s31, 1
        %p371 = scmp.lt.s32.totalorder %s368, 15
        %s372 = scalar_select %p371, %s368, 15
        %s373 = smul.addr %s370, 16
        %s374 = sadd.s32 %s372, %s373
        %s375 = smul.addr %s374, 8
        %s376 = scalar_lea.vmem %s2, %s375
        %p377 = pneg %p124
        %p378 = pneg %p121
        %p379 = scmp.lt.s32.totalorder %s31, 1
        %s380 = scalar_select %p379, %s31, 1
        %s381 = smul.addr %s380, 16
        %s382 = smul.addr %s381, 4
        %s383 = scalar_lea.vmem %s3, %s382
        %p384 = pneg %p150
        %p385 = pneg %p147
        %s386 = sand.u32 %s163, 1
        %s387 = scalar_lea.sflag [#allocation7], %s386
        %s388 = sand.u32 %s163, 1
        %s389 = smul.addr %s388, 64
        %s390 = scalar_lea.vmem [#allocation6], %s389
        %p391 = pneg %p176
        %p392 = pneg %p173
        %p393 = scmp.lt.s32.totalorder %s31, 1
        %s394 = scalar_select %p393, %s31, 1
        %s395 = scalar_lea.vmem %s5, %s394
        %p396 = pneg %p202
        %p397 = pneg %p199
        %p398 = pneg %p230
        %p399 = pneg %p227
        %s400 = sand.u32 %s217, 1
        %s401 = scalar_lea.sflag [#allocation5], %s400
        %s402 = sand.u32 %s217, 1
        %s403 = smul.addr %s402, 64
        %s404 = scalar_lea.vmem [#allocation8], %s403
        %p405 = scmp.lt.s32.totalorder %s31, 1
        %s406 = scalar_select %p405, %s31, 1
        %s407 = smul.addr %s406, 16
        %s408 = smul.addr %s407, 4
        %s409 = scalar_lea.vmem %s0, %s408
        %s410 = smul.u32 4, %s32
        %s411 = smul.u32 16, %s32
        %p412 = scmp.lt.s32.totalorder %s31, 1
        %s413 = scalar_select %p412, %s31, 1
        %p414 = scmp.lt.s32.totalorder %s411, 15
        %s415 = scalar_select %p414, %s411, 15
        %s416 = smul.addr %s413, 16
        %s417 = sadd.s32 %s415, %s416
        %s418 = smul.addr %s417, 8
        %s419 = scalar_lea.vmem %s2, %s418
        %s420 = smul.u32 16, %s32
        %p421 = scmp.lt.s32.totalorder %s31, 1
        %s422 = scalar_select %p421, %s31, 1
        %s423 = smul.addr %s422, 16
        %s424 = smul.addr %s423, 4
        %s425 = scalar_lea.vmem %s3, %s424
        %p426 = scmp.lt.s32.totalorder %s31, 1
        %s427 = scalar_select %p426, %s31, 1
        %s428 = scalar_lea.vmem %s5, %s427
        %s429 = smul.u32 16, %s32
        %p431 = scmp.eq.s32.totalorder %s33, 0
        // Predicated region
        $region53: #{tpu_custom_call.1} parent=43 // pred_check
          %p432 = pneg %p431
        $region54: #{tpu_custom_call.1} parent=43 // pred_check_branch
          %434 = sbr.rel (%p432) target = $region56
        $region55: #{tpu_custom_call.1} parent=43 // pred_region
          %435 = vst [vmem:[#allocation2] sm:$0xff] 0.0
          %436 = vst [vmem:[#allocation2 + $0x8] sm:$0xff] 0.0
          %437 = vst [vmem:[#allocation2 + $0x10] sm:$0xff] 0.0
          %438 = vst [vmem:[#allocation2 + $0x18] sm:$0xff] 0.0
          %439 = vst [vmem:[#allocation2 + $0x20] sm:$0xff] 0.0
          %440 = vst [vmem:[#allocation2 + $0x28] sm:$0xff] 0.0
          %441 = vst [vmem:[#allocation2 + $0x30] sm:$0xff] 0.0
          %442 = vst [vmem:[#allocation2 + $0x38] sm:$0xff] 0.0
          %443 = vst [vmem:[#allocation2 + $0x40] sm:$0xff] 0.0
          %444 = vst [vmem:[#allocation2 + $0x48] sm:$0xff] 0.0
          %445 = vst [vmem:[#allocation2 + $0x50] sm:$0xff] 0.0
          %446 = vst [vmem:[#allocation2 + $0x58] sm:$0xff] 0.0
          %447 = vst [vmem:[#allocation2 + $0x60] sm:$0xff] 0.0
          %448 = vst [vmem:[#allocation2 + $0x68] sm:$0xff] 0.0
          %449 = vst [vmem:[#allocation2 + $0x70] sm:$0xff] 0.0
          %450 = vst [vmem:[#allocation2 + $0x78] sm:$0xff] 0.0
        $region56: #{tpu_custom_call.1} parent=43 // pred_fallthru
          _
        %s451 = smul.u32 %s33, 128
        %s452 = sshra.s32 %s451, 3
        %s453 = sand.u32 %s451, 7
        %s454 = smul.addr %s452, 4
        %s455 = scalar_lea.vmem %s409, %s454
        %v456 = vld [vmem:[%s455] sm:$0xf]
        %v457 = vld [vmem:[%s455 + $0x4] sm:$0xf]
        %v458 = vld [vmem:[%s455 + $0x8] sm:$0xf]
        %v459 = vld [vmem:[%s455 + $0xc] sm:$0xf]
        %v460 = vld [vmem:[%s455 + $0x10] sm:$0xf]
        %v461 = vld [vmem:[%s455 + $0x14] sm:$0xf]
        %v462 = vld [vmem:[%s455 + $0x18] sm:$0xf]
        %v463 = vld [vmem:[%s455 + $0x1c] sm:$0xf]
        %v464 = vld [vmem:[%s455 + $0x20] sm:$0xf]
        %v465 = vld [vmem:[%s455 + $0x24] sm:$0xf]
        %v466 = vld [vmem:[%s455 + $0x28] sm:$0xf]
        %v467 = vld [vmem:[%s455 + $0x2c] sm:$0xf]
        %v468 = vld [vmem:[%s455 + $0x30] sm:$0xf]
        %v469 = vld [vmem:[%s455 + $0x34] sm:$0xf]
        %v470 = vld [vmem:[%s455 + $0x38] sm:$0xf]
        %v471 = vld [vmem:[%s455 + $0x3c] sm:$0xf]
        %v472 = vld [vmem:[%s340] sm:$0xff]
        %v473 = vld [vmem:[%s340 + $0x8] sm:$0xff]
        %v474 = vld [vmem:[%s340 + $0x10] sm:$0xff]
        %v475 = vld [vmem:[%s340 + $0x18] sm:$0xff]
        %v476 = vunpack.c.l.s8.bf16 %v472
        %v477 = vunpack.c.h.s8.bf16 %v472
        %v478 = vunpack.c.l.s8.bf16 %v473
        %v479 = vunpack.c.h.s8.bf16 %v473
        %v480 = vunpack.c.l.s8.bf16 %v474
        %v481 = vunpack.c.h.s8.bf16 %v474
        %v482 = vunpack.c.l.s8.bf16 %v475
        %v483 = vunpack.c.h.s8.bf16 %v475
        %v484 = vld [vmem:[#allocation2] sm:$0xff]
        %v485 = vld [vmem:[#allocation2 + $0x8] sm:$0xff]
        %v486 = vld [vmem:[#allocation2 + $0x10] sm:$0xff]
        %v487 = vld [vmem:[#allocation2 + $0x18] sm:$0xff]
        %v488 = vld [vmem:[#allocation2 + $0x20] sm:$0xff]
        %v489 = vld [vmem:[#allocation2 + $0x28] sm:$0xff]
        %v490 = vld [vmem:[#allocation2 + $0x30] sm:$0xff]
        %v491 = vld [vmem:[#allocation2 + $0x38] sm:$0xff]
        %v492 = vld [vmem:[#allocation2 + $0x40] sm:$0xff]
        %v493 = vld [vmem:[#allocation2 + $0x48] sm:$0xff]
        %v494 = vld [vmem:[#allocation2 + $0x50] sm:$0xff]
        %v495 = vld [vmem:[#allocation2 + $0x58] sm:$0xff]
        %v496 = vld [vmem:[#allocation2 + $0x60] sm:$0xff]
        %v497 = vld [vmem:[#allocation2 + $0x68] sm:$0xff]
        %v498 = vld [vmem:[#allocation2 + $0x70] sm:$0xff]
        %v499 = vld [vmem:[#allocation2 + $0x78] sm:$0xff]
        %v516 = vunpack.c.l.b16 %v456
        %v517 = vunpack.c.l.b16 %v457
        %v518 = vunpack.c.l.b16 %v458
        %v519 = vunpack.c.l.b16 %v459
        %v520 = vunpack.c.l.b16 %v460
        %v521 = vunpack.c.l.b16 %v461
        %v522 = vunpack.c.l.b16 %v462
        %v523 = vunpack.c.l.b16 %v463
        %v524 = vunpack.c.l.b16 %v464
        %v525 = vunpack.c.l.b16 %v465
        %v526 = vunpack.c.l.b16 %v466
        %v527 = vunpack.c.l.b16 %v467
        %v528 = vunpack.c.l.b16 %v468
        %v529 = vunpack.c.l.b16 %v469
        %v530 = vunpack.c.l.b16 %v470
        %v531 = vunpack.c.l.b16 %v471
        %v532 = vpack.c.b16 %v517, %v516
        %v533 = vpack.c.b16 %v519, %v518
        %v534 = vpack.c.b16 %v521, %v520
        %v535 = vpack.c.b16 %v523, %v522
        %v536 = vpack.c.b16 %v525, %v524
        %v537 = vpack.c.b16 %v527, %v526
        %v538 = vpack.c.b16 %v529, %v528
        %v539 = vpack.c.b16 %v531, %v530
        %548 = vmatprep.subr.bf16.mxu0 0
        %549 = vmatpush1.bf16.msra.mxu0 %v532
        %550 = vmatprep.subr.bf16.mxu0 0
        %551 = vmatpush1.bf16.msra.mxu0 %v533
        %552 = vmatprep.subr.bf16.mxu0 0
        %553 = vmatpush1.bf16.msra.mxu0 %v534
        %554 = vmatprep.subr.bf16.mxu0 0
        %555 = vmatpush1.bf16.msra.mxu0 %v535
        %556 = vmatprep.subr.bf16.mxu0 0
        %557 = vmatpush1.bf16.msra.mxu0 %v536
        %558 = vmatprep.subr.bf16.mxu0 0
        %559 = vmatpush1.bf16.msra.mxu0 %v537
        %560 = vmatprep.subr.bf16.mxu0 0
        %561 = vmatpush1.bf16.msra.mxu0 %v538
        %562 = vmatprep.subr.bf16.mxu0 0
        %563 = vmatpush1.bf16.msra.mxu0 %v539
        %564 = vmatprep.subr.bf16.mxu0 0
        %565 = vmatpush1.bf16.msra.mxu0 0
        %566 = vmatprep.subr.bf16.mxu0 0
        %567 = vmatpush1.bf16.msra.mxu0 0
        %568 = vmatprep.subr.bf16.mxu0 0
        %569 = vmatpush1.bf16.msra.mxu0 0
        %570 = vmatprep.subr.bf16.mxu0 0
        %571 = vmatpush1.bf16.msra.mxu0 0
        %572 = vmatprep.subr.bf16.mxu0 0
        %573 = vmatpush1.bf16.msra.mxu0 0
        %574 = vmatprep.subr.bf16.mxu0 0
        %575 = vmatpush1.bf16.msra.mxu0 0
        %576 = vmatprep.subr.bf16.mxu0 0
        %577 = vmatpush1.bf16.msra.mxu0 0
        %578 = vmatprep.subr.bf16.mxu0 0
        %579 = vmatpush1.bf16.msra.mxu0 0
        %580 = vmatprep.mubr.bf16.mxu0 0
        %581 = vmatmul.mubr.bf16.gmra.mrb[0].mxu0 %v476
        %v582 = vpop.f32.mrb[0].mxu0
        %v583 = vadd.f32 0.0, %v582
        %v584 = vpop.f32.mrb[0].mxu0
        %v585 = vpop.f32.mrb[0].mxu0
        %v586 = vadd.f32 0.0, %v585
        %v587 = vpop.f32.mrb[0].mxu0
        %588 = vmatprep.mubr.bf16.mxu0 0
        %589 = vmatmul.mubr.bf16.gmra.mrb[0].mxu0 %v477
        %v590 = vpop.f32.mrb[0].mxu0
        %v591 = vadd.f32 0.0, %v590
        %v592 = vpop.f32.mrb[0].mxu0
        %v593 = vpop.f32.mrb[0].mxu0
        %v594 = vadd.f32 0.0, %v593
        %v595 = vpop.f32.mrb[0].mxu0
        %596 = vmatprep.mubr.bf16.mxu0 0
        %597 = vmatmul.mubr.bf16.gmra.mrb[0].mxu0 %v478
        %v598 = vpop.f32.mrb[0].mxu0
        %v599 = vadd.f32 0.0, %v598
        %v600 = vpop.f32.mrb[0].mxu0
        %v601 = vpop.f32.mrb[0].mxu0
        %v602 = vadd.f32 0.0, %v601
        %v603 = vpop.f32.mrb[0].mxu0
        %604 = vmatprep.mubr.bf16.mxu0 0
        %605 = vmatmul.mubr.bf16.gmra.mrb[0].mxu0 %v479
        %v606 = vpop.f32.mrb[0].mxu0
        %v607 = vadd.f32 0.0, %v606
        %v608 = vpop.f32.mrb[0].mxu0
        %v609 = vpop.f32.mrb[0].mxu0
        %v610 = vadd.f32 0.0, %v609
        %v611 = vpop.f32.mrb[0].mxu0
        %612 = vmatprep.mubr.bf16.mxu0 0
        %613 = vmatmul.mubr.bf16.gmra.mrb[0].mxu0 %v480
        %v614 = vpop.f32.mrb[0].mxu0
        %v615 = vadd.f32 0.0, %v614
        %v616 = vpop.f32.mrb[0].mxu0
        %v617 = vpop.f32.mrb[0].mxu0
        %v618 = vadd.f32 0.0, %v617
        %v619 = vpop.f32.mrb[0].mxu0
        %620 = vmatprep.mubr.bf16.mxu0 0
        %621 = vmatmul.mubr.bf16.gmra.mrb[0].mxu0 %v481
        %v622 = vpop.f32.mrb[0].mxu0
        %v623 = vadd.f32 0.0, %v622
        %v624 = vpop.f32.mrb[0].mxu0
        %v625 = vpop.f32.mrb[0].mxu0
        %v626 = vadd.f32 0.0, %v625
        %v627 = vpop.f32.mrb[0].mxu0
        %628 = vmatprep.mubr.bf16.mxu0 0
        %629 = vmatmul.mubr.bf16.gmra.mrb[0].mxu0 %v482
        %v630 = vpop.f32.mrb[0].mxu0
        %v631 = vadd.f32 0.0, %v630
        %v632 = vpop.f32.mrb[0].mxu0
        %v633 = vpop.f32.mrb[0].mxu0
        %v634 = vadd.f32 0.0, %v633
        %v635 = vpop.f32.mrb[0].mxu0
        %636 = vmatprep.mubr.bf16.mxu0 0
        %637 = vmatmul.mubr.bf16.gmra.mrb[0].mxu0 %v483
        %v638 = vpop.f32.mrb[0].mxu0
        %v639 = vadd.f32 0.0, %v638
        %v640 = vpop.f32.mrb[0].mxu0
        %v641 = vpop.f32.mrb[0].mxu0
        %v642 = vadd.f32 0.0, %v641
        %v643 = vpop.f32.mrb[0].mxu0
        %644 = vdwg.mxu0
        %v645 = vadd.f32 %v484, %v583
        %v646 = vadd.f32 %v485, %v586
        %v647 = vadd.f32 %v486, %v591
        %v648 = vadd.f32 %v487, %v594
        %v649 = vadd.f32 %v488, %v599
        %v650 = vadd.f32 %v489, %v602
        %v651 = vadd.f32 %v490, %v607
        %v652 = vadd.f32 %v491, %v610
        %v653 = vadd.f32 %v492, %v615
        %v654 = vadd.f32 %v493, %v618
        %v655 = vadd.f32 %v494, %v623
        %v656 = vadd.f32 %v495, %v626
        %v657 = vadd.f32 %v496, %v631
        %v658 = vadd.f32 %v497, %v634
        %v659 = vadd.f32 %v498, %v639
        %v660 = vadd.f32 %v499, %v642
        %661 = vst [vmem:[#allocation2] sm:$0xff] %v645
        %662 = vst [vmem:[#allocation2 + $0x8] sm:$0xff] %v646
        %663 = vst [vmem:[#allocation2 + $0x10] sm:$0xff] %v647
        %664 = vst [vmem:[#allocation2 + $0x18] sm:$0xff] %v648
        %665 = vst [vmem:[#allocation2 + $0x20] sm:$0xff] %v649
        %666 = vst [vmem:[#allocation2 + $0x28] sm:$0xff] %v650
        %667 = vst [vmem:[#allocation2 + $0x30] sm:$0xff] %v651
        %668 = vst [vmem:[#allocation2 + $0x38] sm:$0xff] %v652
        %669 = vst [vmem:[#allocation2 + $0x40] sm:$0xff] %v653
        %670 = vst [vmem:[#allocation2 + $0x48] sm:$0xff] %v654
        %671 = vst [vmem:[#allocation2 + $0x50] sm:$0xff] %v655
        %672 = vst [vmem:[#allocation2 + $0x58] sm:$0xff] %v656
        %673 = vst [vmem:[#allocation2 + $0x60] sm:$0xff] %v657
        %674 = vst [vmem:[#allocation2 + $0x68] sm:$0xff] %v658
        %675 = vst [vmem:[#allocation2 + $0x70] sm:$0xff] %v659
        %676 = vst [vmem:[#allocation2 + $0x78] sm:$0xff] %v660
        // Predicated region
        $region57: #{tpu_custom_call.1} parent=43 // pred_check
          %p677 = pneg %p431
        $region58: #{tpu_custom_call.1} parent=43 // pred_check_branch
          %679 = sbr.rel (%p677) target = $region60
        $region59: #{tpu_custom_call.1} parent=43 // pred_region
          %v680 = vld [vmem:[#allocation2] sm:$0xff]
          %v681 = vld [vmem:[#allocation2 + $0x8] sm:$0xff]
          %v682 = vld [vmem:[#allocation2 + $0x10] sm:$0xff]
          %v683 = vld [vmem:[#allocation2 + $0x18] sm:$0xff]
          %v684 = vld [vmem:[#allocation2 + $0x20] sm:$0xff]
          %v685 = vld [vmem:[#allocation2 + $0x28] sm:$0xff]
          %v686 = vld [vmem:[#allocation2 + $0x30] sm:$0xff]
          %v687 = vld [vmem:[#allocation2 + $0x38] sm:$0xff]
          %v688 = vld [vmem:[#allocation2 + $0x40] sm:$0xff]
          %v689 = vld [vmem:[#allocation2 + $0x48] sm:$0xff]
          %v690 = vld [vmem:[#allocation2 + $0x50] sm:$0xff]
          %v691 = vld [vmem:[#allocation2 + $0x58] sm:$0xff]
          %v692 = vld [vmem:[#allocation2 + $0x60] sm:$0xff]
          %v693 = vld [vmem:[#allocation2 + $0x68] sm:$0xff]
          %v694 = vld [vmem:[#allocation2 + $0x70] sm:$0xff]
          %v695 = vld [vmem:[#allocation2 + $0x78] sm:$0xff]
          %v696 = vld [vmem:[%s419] sm:$0xff]
          %v697 = vld [vmem:[%s419 + $0x8] sm:$0xff]
          %v698 = vld [vmem:[%s419 + $0x10] sm:$0xff]
          %v699 = vld [vmem:[%s419 + $0x18] sm:$0xff]
          %v700 = vld [vmem:[%s419 + $0x20] sm:$0xff]
          %v701 = vld [vmem:[%s419 + $0x28] sm:$0xff]
          %v702 = vld [vmem:[%s419 + $0x30] sm:$0xff]
          %v703 = vld [vmem:[%s419 + $0x38] sm:$0xff]
          %v704 = vld [vmem:[%s419 + $0x40] sm:$0xff]
          %v705 = vld [vmem:[%s419 + $0x48] sm:$0xff]
          %v706 = vld [vmem:[%s419 + $0x50] sm:$0xff]
          %v707 = vld [vmem:[%s419 + $0x58] sm:$0xff]
          %v708 = vld [vmem:[%s419 + $0x60] sm:$0xff]
          %v709 = vld [vmem:[%s419 + $0x68] sm:$0xff]
          %v710 = vld [vmem:[%s419 + $0x70] sm:$0xff]
          %v711 = vld [vmem:[%s419 + $0x78] sm:$0xff]
          %713 = vset.pattern.permute.xlu0 0
          %714 = vperm.xlu0 %713, %v696
          %v715 = vpop.permute.xlu0 %714
          %718 = vset.pattern.permute.xlu0 0
          %719 = vperm.xlu0 %718, %v697
          %v720 = vpop.permute.xlu0 %719
          %723 = vset.pattern.permute.xlu0 0
          %724 = vperm.xlu0 %723, %v698
          %v725 = vpop.permute.xlu0 %724
          %728 = vset.pattern.permute.xlu0 0
          %729 = vperm.xlu0 %728, %v699
          %v730 = vpop.permute.xlu0 %729
          %733 = vset.pattern.permute.xlu0 0
          %734 = vperm.xlu0 %733, %v700
          %v735 = vpop.permute.xlu0 %734
          %738 = vset.pattern.permute.xlu0 0
          %739 = vperm.xlu0 %738, %v701
          %v740 = vpop.permute.xlu0 %739
          %743 = vset.pattern.permute.xlu0 0
          %744 = vperm.xlu0 %743, %v702
          %v745 = vpop.permute.xlu0 %744
          %748 = vset.pattern.permute.xlu0 0
          %749 = vperm.xlu0 %748, %v703
          %v750 = vpop.permute.xlu0 %749
          %753 = vset.pattern.permute.xlu0 0
          %754 = vperm.xlu0 %753, %v704
          %v755 = vpop.permute.xlu0 %754
          %758 = vset.pattern.permute.xlu0 0
          %759 = vperm.xlu0 %758, %v705
          %v760 = vpop.permute.xlu0 %759
          %763 = vset.pattern.permute.xlu0 0
          %764 = vperm.xlu0 %763, %v706
          %v765 = vpop.permute.xlu0 %764
          %768 = vset.pattern.permute.xlu0 0
          %769 = vperm.xlu0 %768, %v707
          %v770 = vpop.permute.xlu0 %769
          %773 = vset.pattern.permute.xlu0 0
          %774 = vperm.xlu0 %773, %v708
          %v775 = vpop.permute.xlu0 %774
          %778 = vset.pattern.permute.xlu0 0
          %779 = vperm.xlu0 %778, %v709
          %v780 = vpop.permute.xlu0 %779
          %783 = vset.pattern.permute.xlu0 0
          %784 = vperm.xlu0 %783, %v710
          %v785 = vpop.permute.xlu0 %784
          %788 = vset.pattern.permute.xlu0 0
          %789 = vperm.xlu0 %788, %v711
          %v790 = vpop.permute.xlu0 %789
          %v792 = vmul.f32 %v680, %v715
          %v793 = vmul.f32 %v681, %v720
          %v794 = vmul.f32 %v682, %v725
          %v795 = vmul.f32 %v683, %v730
          %v796 = vmul.f32 %v684, %v735
          %v797 = vmul.f32 %v685, %v740
          %v798 = vmul.f32 %v686, %v745
          %v799 = vmul.f32 %v687, %v750
          %v800 = vmul.f32 %v688, %v755
          %v801 = vmul.f32 %v689, %v760
          %v802 = vmul.f32 %v690, %v765
          %v803 = vmul.f32 %v691, %v770
          %v804 = vmul.f32 %v692, %v775
          %v805 = vmul.f32 %v693, %v780
          %v806 = vmul.f32 %v694, %v785
          %v807 = vmul.f32 %v695, %v790
          %v808 = vpack.c.bf16 %v793, %v792
          %v809 = vpack.c.bf16 %v795, %v794
          %v810 = vpack.c.bf16 %v797, %v796
          %v811 = vpack.c.bf16 %v799, %v798
          %v812 = vpack.c.bf16 %v801, %v800
          %v813 = vpack.c.bf16 %v803, %v802
          %v814 = vpack.c.bf16 %v805, %v804
          %v815 = vpack.c.bf16 %v807, %v806
          %s816 = smul.u32 %s32, 128
          %s817 = sshra.s32 %s816, 3
          %s818 = sand.u32 %s816, 7
          %s819 = smul.addr %s817, 4
          %s820 = scalar_lea.vmem %s409, %s819
          %v821 = vld [vmem:[%s820] sm:$0xf]
          %v822 = vld [vmem:[%s820 + $0x4] sm:$0xf]
          %v823 = vld [vmem:[%s820 + $0x8] sm:$0xf]
          %v824 = vld [vmem:[%s820 + $0xc] sm:$0xf]
          %v825 = vld [vmem:[%s820 + $0x10] sm:$0xf]
          %v826 = vld [vmem:[%s820 + $0x14] sm:$0xf]
          %v827 = vld [vmem:[%s820 + $0x18] sm:$0xf]
          %v828 = vld [vmem:[%s820 + $0x1c] sm:$0xf]
          %v829 = vld [vmem:[%s820 + $0x20] sm:$0xf]
          %v830 = vld [vmem:[%s820 + $0x24] sm:$0xf]
          %v831 = vld [vmem:[%s820 + $0x28] sm:$0xf]
          %v832 = vld [vmem:[%s820 + $0x2c] sm:$0xf]
          %v833 = vld [vmem:[%s820 + $0x30] sm:$0xf]
          %v834 = vld [vmem:[%s820 + $0x34] sm:$0xf]
          %v835 = vld [vmem:[%s820 + $0x38] sm:$0xf]
          %v836 = vld [vmem:[%s820 + $0x3c] sm:$0xf]
          %v837 = vld [vmem:[%s425] sm:$0xf]
          %v838 = vld [vmem:[%s425 + $0x4] sm:$0xf]
          %v839 = vld [vmem:[%s425 + $0x8] sm:$0xf]
          %v840 = vld [vmem:[%s425 + $0xc] sm:$0xf]
          %v841 = vld [vmem:[%s425 + $0x10] sm:$0xf]
          %v842 = vld [vmem:[%s425 + $0x14] sm:$0xf]
          %v843 = vld [vmem:[%s425 + $0x18] sm:$0xf]
          %v844 = vld [vmem:[%s425 + $0x1c] sm:$0xf]
          %v845 = vld [vmem:[%s425 + $0x20] sm:$0xf]
          %v846 = vld [vmem:[%s425 + $0x24] sm:$0xf]
          %v847 = vld [vmem:[%s425 + $0x28] sm:$0xf]
          %v848 = vld [vmem:[%s425 + $0x2c] sm:$0xf]
          %v849 = vld [vmem:[%s425 + $0x30] sm:$0xf]
          %v850 = vld [vmem:[%s425 + $0x34] sm:$0xf]
          %v851 = vld [vmem:[%s425 + $0x38] sm:$0xf]
          %v852 = vld [vmem:[%s425 + $0x3c] sm:$0xf]
          %v853 = vld [vmem:[%s349] sm:$0xf]
          %v854 = vld [vmem:[%s349 + $0x4] sm:$0xf]
          %v855 = vld [vmem:[%s349 + $0x8] sm:$0xf]
          %v856 = vld [vmem:[%s349 + $0xc] sm:$0xf]
          %v857 = vld [vmem:[%s349 + $0x10] sm:$0xf]
          %v858 = vld [vmem:[%s349 + $0x14] sm:$0xf]
          %v859 = vld [vmem:[%s349 + $0x18] sm:$0xf]
          %v860 = vld [vmem:[%s349 + $0x1c] sm:$0xf]
          %v861 = vld [vmem:[%s349 + $0x20] sm:$0xf]
          %v862 = vld [vmem:[%s349 + $0x24] sm:$0xf]
          %v863 = vld [vmem:[%s349 + $0x28] sm:$0xf]
          %v864 = vld [vmem:[%s349 + $0x2c] sm:$0xf]
          %v865 = vld [vmem:[%s349 + $0x30] sm:$0xf]
          %v866 = vld [vmem:[%s349 + $0x34] sm:$0xf]
          %v867 = vld [vmem:[%s349 + $0x38] sm:$0xf]
          %v868 = vld [vmem:[%s349 + $0x3c] sm:$0xf]
          %v885 = vunpack.c.l.b16 %v821
          %v886 = vunpack.c.l.b16 %v822
          %v887 = vunpack.c.l.b16 %v823
          %v888 = vunpack.c.l.b16 %v824
          %v889 = vunpack.c.l.b16 %v825
          %v890 = vunpack.c.l.b16 %v826
          %v891 = vunpack.c.l.b16 %v827
          %v892 = vunpack.c.l.b16 %v828
          %v893 = vunpack.c.l.b16 %v829
          %v894 = vunpack.c.l.b16 %v830
          %v895 = vunpack.c.l.b16 %v831
          %v896 = vunpack.c.l.b16 %v832
          %v897 = vunpack.c.l.b16 %v833
          %v898 = vunpack.c.l.b16 %v834
          %v899 = vunpack.c.l.b16 %v835
          %v900 = vunpack.c.l.b16 %v836
          %v901 = vpack.c.b16 %v886, %v885
          %v902 = vpack.c.b16 %v888, %v887
          %v903 = vpack.c.b16 %v890, %v889
          %v904 = vpack.c.b16 %v892, %v891
          %v905 = vpack.c.b16 %v894, %v893
          %v906 = vpack.c.b16 %v896, %v895
          %v907 = vpack.c.b16 %v898, %v897
          %v908 = vpack.c.b16 %v900, %v899
          %v933 = vunpack.c.l.b16 %v853
          %v934 = vunpack.c.l.b16 %v854
          %v935 = vunpack.c.l.b16 %v855
          %v936 = vunpack.c.l.b16 %v856
          %v937 = vunpack.c.l.b16 %v857
          %v938 = vunpack.c.l.b16 %v858
          %v939 = vunpack.c.l.b16 %v859
          %v940 = vunpack.c.l.b16 %v860
          %v941 = vunpack.c.l.b16 %v861
          %v942 = vunpack.c.l.b16 %v862
          %v943 = vunpack.c.l.b16 %v863
          %v944 = vunpack.c.l.b16 %v864
          %v945 = vunpack.c.l.b16 %v865
          %v946 = vunpack.c.l.b16 %v866
          %v947 = vunpack.c.l.b16 %v867
          %v948 = vunpack.c.l.b16 %v868
          %v949 = vpack.c.b16 %v934, %v933
          %v950 = vpack.c.b16 %v936, %v935
          %v951 = vpack.c.b16 %v938, %v937
          %v952 = vpack.c.b16 %v940, %v939
          %v953 = vpack.c.b16 %v942, %v941
          %v954 = vpack.c.b16 %v944, %v943
          %v955 = vpack.c.b16 %v946, %v945
          %v956 = vpack.c.b16 %v948, %v947
          %965 = vmatprep.subr.bf16.mxu0 0
          %966 = vmatpush1.bf16.msra.mxu0 %v949
          %967 = vmatprep.subr.bf16.mxu0 0
          %968 = vmatpush1.bf16.msra.mxu0 %v950
          %969 = vmatprep.subr.bf16.mxu0 0
          %970 = vmatpush1.bf16.msra.mxu0 %v951
          %971 = vmatprep.subr.bf16.mxu0 0
          %972 = vmatpush1.bf16.msra.mxu0 %v952
          %973 = vmatprep.subr.bf16.mxu0 0
          %974 = vmatpush1.bf16.msra.mxu0 %v953
          %975 = vmatprep.subr.bf16.mxu0 0
          %976 = vmatpush1.bf16.msra.mxu0 %v954
          %977 = vmatprep.subr.bf16.mxu0 0
          %978 = vmatpush1.bf16.msra.mxu0 %v955
          %979 = vmatprep.subr.bf16.mxu0 0
          %980 = vmatpush1.bf16.msra.mxu0 %v956
          %981 = vmatprep.subr.bf16.mxu0 0
          %982 = vmatpush1.bf16.msra.mxu0 0
          %983 = vmatprep.subr.bf16.mxu0 0
          %984 = vmatpush1.bf16.msra.mxu0 0
          %985 = vmatprep.subr.bf16.mxu0 0
          %986 = vmatpush1.bf16.msra.mxu0 0
          %987 = vmatprep.subr.bf16.mxu0 0
          %988 = vmatpush1.bf16.msra.mxu0 0
          %989 = vmatprep.subr.bf16.mxu0 0
          %990 = vmatpush1.bf16.msra.mxu0 0
          %991 = vmatprep.subr.bf16.mxu0 0
          %992 = vmatpush1.bf16.msra.mxu0 0
          %993 = vmatprep.subr.bf16.mxu0 0
          %994 = vmatpush1.bf16.msra.mxu0 0
          %995 = vmatprep.subr.bf16.mxu0 0
          %996 = vmatpush1.bf16.msra.mxu0 0
          %997 = vmatprep.mubr.bf16.mxu0 0
          %998 = vmatmul.mubr.bf16.gmra.mrb[0].mxu0 %v901
          %v999 = vpop.f32.mrb[0].mxu0
          %v1000 = vadd.f32 0.0, %v999
          %v1001 = vpop.f32.mrb[0].mxu0
          %v1002 = vpop.f32.mrb[0].mxu0
          %v1003 = vadd.f32 0.0, %v1002
          %v1004 = vpop.f32.mrb[0].mxu0
          %1005 = vmatprep.mubr.bf16.mxu0 0
          %1006 = vmatmul.mubr.bf16.gmra.mrb[0].mxu0 %v902
          %v1007 = vpop.f32.mrb[0].mxu0
          %v1008 = vadd.f32 0.0, %v1007
          %v1009 = vpop.f32.mrb[0].mxu0
          %v1010 = vpop.f32.mrb[0].mxu0
          %v1011 = vadd.f32 0.0, %v1010
          %v1012 = vpop.f32.mrb[0].mxu0
          %1013 = vmatprep.mubr.bf16.mxu0 0
          %1014 = vmatmul.mubr.bf16.gmra.mrb[0].mxu0 %v903
          %v1015 = vpop.f32.mrb[0].mxu0
          %v1016 = vadd.f32 0.0, %v1015
          %v1017 = vpop.f32.mrb[0].mxu0
          %v1018 = vpop.f32.mrb[0].mxu0
          %v1019 = vadd.f32 0.0, %v1018
          %v1020 = vpop.f32.mrb[0].mxu0
          %1021 = vmatprep.mubr.bf16.mxu0 0
          %1022 = vmatmul.mubr.bf16.gmra.mrb[0].mxu0 %v904
          %v1023 = vpop.f32.mrb[0].mxu0
          %v1024 = vadd.f32 0.0, %v1023
          %v1025 = vpop.f32.mrb[0].mxu0
          %v1026 = vpop.f32.mrb[0].mxu0
          %v1027 = vadd.f32 0.0, %v1026
          %v1028 = vpop.f32.mrb[0].mxu0
          %1029 = vmatprep.mubr.bf16.mxu0 0
          %1030 = vmatmul.mubr.bf16.gmra.mrb[0].mxu0 %v905
          %v1031 = vpop.f32.mrb[0].mxu0
          %v1032 = vadd.f32 0.0, %v1031
          %v1033 = vpop.f32.mrb[0].mxu0
          %v1034 = vpop.f32.mrb[0].mxu0
          %v1035 = vadd.f32 0.0, %v1034
          %v1036 = vpop.f32.mrb[0].mxu0
          %1037 = vmatprep.mubr.bf16.mxu0 0
          %1038 = vmatmul.mubr.bf16.gmra.mrb[0].mxu0 %v906
          %v1039 = vpop.f32.mrb[0].mxu0
          %v1040 = vadd.f32 0.0, %v1039
          %v1041 = vpop.f32.mrb[0].mxu0
          %v1042 = vpop.f32.mrb[0].mxu0
          %v1043 = vadd.f32 0.0, %v1042
          %v1044 = vpop.f32.mrb[0].mxu0
          %1045 = vmatprep.mubr.bf16.mxu0 0
          %1046 = vmatmul.mubr.bf16.gmra.mrb[0].mxu0 %v907
          %v1047 = vpop.f32.mrb[0].mxu0
          %v1048 = vadd.f32 0.0, %v1047
          %v1049 = vpop.f32.mrb[0].mxu0
          %v1050 = vpop.f32.mrb[0].mxu0
          %v1051 = vadd.f32 0.0, %v1050
          %v1052 = vpop.f32.mrb[0].mxu0
          %1053 = vmatprep.mubr.bf16.mxu0 0
          %1054 = vmatmul.mubr.bf16.gmra.mrb[0].mxu0 %v908
          %v1055 = vpop.f32.mrb[0].mxu0
          %v1056 = vadd.f32 0.0, %v1055
          %v1057 = vpop.f32.mrb[0].mxu0
          %v1058 = vpop.f32.mrb[0].mxu0
          %v1059 = vadd.f32 0.0, %v1058
          %v1060 = vpop.f32.mrb[0].mxu0
          %1061 = vdwg.mxu0
          %v1078 = vunpack.c.l.b16 %v837
          %v1079 = vunpack.c.l.b16 %v838
          %v1080 = vunpack.c.l.b16 %v839
          %v1081 = vunpack.c.l.b16 %v840
          %v1082 = vunpack.c.l.b16 %v841
          %v1083 = vunpack.c.l.b16 %v842
          %v1084 = vunpack.c.l.b16 %v843
          %v1085 = vunpack.c.l.b16 %v844
          %v1086 = vunpack.c.l.b16 %v845
          %v1087 = vunpack.c.l.b16 %v846
          %v1088 = vunpack.c.l.b16 %v847
          %v1089 = vunpack.c.l.b16 %v848
          %v1090 = vunpack.c.l.b16 %v849
          %v1091 = vunpack.c.l.b16 %v850
          %v1092 = vunpack.c.l.b16 %v851
          %v1093 = vunpack.c.l.b16 %v852
          %v1094 = vpack.c.b16 %v1079, %v1078
          %v1095 = vpack.c.b16 %v1081, %v1080
          %v1096 = vpack.c.b16 %v1083, %v1082
          %v1097 = vpack.c.b16 %v1085, %v1084
          %v1098 = vpack.c.b16 %v1087, %v1086
          %v1099 = vpack.c.b16 %v1089, %v1088
          %v1100 = vpack.c.b16 %v1091, %v1090
          %v1101 = vpack.c.b16 %v1093, %v1092
          %1110 = vmatprep.subr.bf16.mxu0 0
          %1111 = vmatpush1.bf16.msra.mxu0 %v1094
          %1112 = vmatprep.subr.bf16.mxu0 0
          %1113 = vmatpush1.bf16.msra.mxu0 %v1095
          %1114 = vmatprep.subr.bf16.mxu0 0
          %1115 = vmatpush1.bf16.msra.mxu0 %v1096
          %1116 = vmatprep.subr.bf16.mxu0 0
          %1117 = vmatpush1.bf16.msra.mxu0 %v1097
          %1118 = vmatprep.subr.bf16.mxu0 0
          %1119 = vmatpush1.bf16.msra.mxu0 %v1098
          %1120 = vmatprep.subr.bf16.mxu0 0
          %1121 = vmatpush1.bf16.msra.mxu0 %v1099
          %1122 = vmatprep.subr.bf16.mxu0 0
          %1123 = vmatpush1.bf16.msra.mxu0 %v1100
          %1124 = vmatprep.subr.bf16.mxu0 0
          %1125 = vmatpush1.bf16.msra.mxu0 %v1101
          %1126 = vmatprep.subr.bf16.mxu0 0
          %1127 = vmatpush1.bf16.msra.mxu0 0
          %1128 = vmatprep.subr.bf16.mxu0 0
          %1129 = vmatpush1.bf16.msra.mxu0 0
          %1130 = vmatprep.subr.bf16.mxu0 0
          %1131 = vmatpush1.bf16.msra.mxu0 0
          %1132 = vmatprep.subr.bf16.mxu0 0
          %1133 = vmatpush1.bf16.msra.mxu0 0
          %1134 = vmatprep.subr.bf16.mxu0 0
          %1135 = vmatpush1.bf16.msra.mxu0 0
          %1136 = vmatprep.subr.bf16.mxu0 0
          %1137 = vmatpush1.bf16.msra.mxu0 0
          %1138 = vmatprep.subr.bf16.mxu0 0
          %1139 = vmatpush1.bf16.msra.mxu0 0
          %1140 = vmatprep.subr.bf16.mxu0 0
          %1141 = vmatpush1.bf16.msra.mxu0 0
          %1142 = vmatprep.mubr.bf16.mxu0 0
          %1143 = vmatmul.mubr.bf16.gmra.mrb[0].mxu0 %v808
          %v1144 = vpop.f32.mrb[0].mxu0
          %v1145 = vadd.f32 %v1000, %v1144
          %v1146 = vpop.f32.mrb[0].mxu0
          %v1147 = vpop.f32.mrb[0].mxu0
          %v1148 = vadd.f32 %v1003, %v1147
          %v1149 = vpop.f32.mrb[0].mxu0
          %1150 = vmatprep.mubr.bf16.mxu0 0
          %1151 = vmatmul.mubr.bf16.gmra.mrb[0].mxu0 %v809
          %v1152 = vpop.f32.mrb[0].mxu0
          %v1153 = vadd.f32 %v1008, %v1152
          %v1154 = vpop.f32.mrb[0].mxu0
          %v1155 = vpop.f32.mrb[0].mxu0
          %v1156 = vadd.f32 %v1011, %v1155
          %v1157 = vpop.f32.mrb[0].mxu0
          %1158 = vmatprep.mubr.bf16.mxu0 0
          %1159 = vmatmul.mubr.bf16.gmra.mrb[0].mxu0 %v810
          %v1160 = vpop.f32.mrb[0].mxu0
          %v1161 = vadd.f32 %v1016, %v1160
          %v1162 = vpop.f32.mrb[0].mxu0
          %v1163 = vpop.f32.mrb[0].mxu0
          %v1164 = vadd.f32 %v1019, %v1163
          %v1165 = vpop.f32.mrb[0].mxu0
          %1166 = vmatprep.mubr.bf16.mxu0 0
          %1167 = vmatmul.mubr.bf16.gmra.mrb[0].mxu0 %v811
          %v1168 = vpop.f32.mrb[0].mxu0
          %v1169 = vadd.f32 %v1024, %v1168
          %v1170 = vpop.f32.mrb[0].mxu0
          %v1171 = vpop.f32.mrb[0].mxu0
          %v1172 = vadd.f32 %v1027, %v1171
          %v1173 = vpop.f32.mrb[0].mxu0
          %1174 = vmatprep.mubr.bf16.mxu0 0
          %1175 = vmatmul.mubr.bf16.gmra.mrb[0].mxu0 %v812
          %v1176 = vpop.f32.mrb[0].mxu0
          %v1177 = vadd.f32 %v1032, %v1176
          %v1178 = vpop.f32.mrb[0].mxu0
          %v1179 = vpop.f32.mrb[0].mxu0
          %v1180 = vadd.f32 %v1035, %v1179
          %v1181 = vpop.f32.mrb[0].mxu0
          %1182 = vmatprep.mubr.bf16.mxu0 0
          %1183 = vmatmul.mubr.bf16.gmra.mrb[0].mxu0 %v813
          %v1184 = vpop.f32.mrb[0].mxu0
          %v1185 = vadd.f32 %v1040, %v1184
          %v1186 = vpop.f32.mrb[0].mxu0
          %v1187 = vpop.f32.mrb[0].mxu0
          %v1188 = vadd.f32 %v1043, %v1187
          %v1189 = vpop.f32.mrb[0].mxu0
          %1190 = vmatprep.mubr.bf16.mxu0 0
          %1191 = vmatmul.mubr.bf16.gmra.mrb[0].mxu0 %v814
          %v1192 = vpop.f32.mrb[0].mxu0
          %v1193 = vadd.f32 %v1048, %v1192
          %v1194 = vpop.f32.mrb[0].mxu0
          %v1195 = vpop.f32.mrb[0].mxu0
          %v1196 = vadd.f32 %v1051, %v1195
          %v1197 = vpop.f32.mrb[0].mxu0
          %1198 = vmatprep.mubr.bf16.mxu0 0
          %1199 = vmatmul.mubr.bf16.gmra.mrb[0].mxu0 %v815
          %v1200 = vpop.f32.mrb[0].mxu0
          %v1201 = vadd.f32 %v1056, %v1200
          %v1202 = vpop.f32.mrb[0].mxu0
          %v1203 = vpop.f32.mrb[0].mxu0
          %v1204 = vadd.f32 %v1059, %v1203
          %v1205 = vpop.f32.mrb[0].mxu0
          %1206 = vdwg.mxu0
          %v1207 = vld [vmem:[%s428] sm:$0x1]
          %v1209 = vlaneseq
          %v1210 = vshrl.u32 %v1209, 7
          %v1211 = vsub.s32 0, %v1210
          %v1212 = vrot.slane %v1207, %v1211
          %v1214 = vadd.f32 %v1145, %v1212
          %v1215 = vadd.f32 %v1148, %v1212
          %v1216 = vadd.f32 %v1153, %v1212
          %v1217 = vadd.f32 %v1156, %v1212
          %v1218 = vadd.f32 %v1161, %v1212
          %v1219 = vadd.f32 %v1164, %v1212
          %v1220 = vadd.f32 %v1169, %v1212
          %v1221 = vadd.f32 %v1172, %v1212
          %v1222 = vadd.f32 %v1177, %v1212
          %v1223 = vadd.f32 %v1180, %v1212
          %v1224 = vadd.f32 %v1185, %v1212
          %v1225 = vadd.f32 %v1188, %v1212
          %v1226 = vadd.f32 %v1193, %v1212
          %v1227 = vadd.f32 %v1196, %v1212
          %v1228 = vadd.f32 %v1201, %v1212
          %v1229 = vadd.f32 %v1204, %v1212
          %v1230 = vmax.f32 %v1214, 0.0
          %v1231 = vmax.f32 %v1215, 0.0
          %v1232 = vmax.f32 %v1216, 0.0
          %v1233 = vmax.f32 %v1217, 0.0
          %v1234 = vmax.f32 %v1218, 0.0
          %v1235 = vmax.f32 %v1219, 0.0
          %v1236 = vmax.f32 %v1220, 0.0
          %v1237 = vmax.f32 %v1221, 0.0
          %v1238 = vmax.f32 %v1222, 0.0
          %v1239 = vmax.f32 %v1223, 0.0
          %v1240 = vmax.f32 %v1224, 0.0
          %v1241 = vmax.f32 %v1225, 0.0
          %v1242 = vmax.f32 %v1226, 0.0
          %v1243 = vmax.f32 %v1227, 0.0
          %v1244 = vmax.f32 %v1228, 0.0
          %v1245 = vmax.f32 %v1229, 0.0
          %v1246 = vpack.c.bf16 %v1231, %v1230
          %v1247 = vpack.c.bf16 %v1233, %v1232
          %v1248 = vpack.c.bf16 %v1235, %v1234
          %v1249 = vpack.c.bf16 %v1237, %v1236
          %v1250 = vpack.c.bf16 %v1239, %v1238
          %v1251 = vpack.c.bf16 %v1241, %v1240
          %v1252 = vpack.c.bf16 %v1243, %v1242
          %v1253 = vpack.c.bf16 %v1245, %v1244
          %v1262 = vunpack.c.l.b16 %v1246
          %v1263 = vunpack.c.h.b16 %v1246
          %v1264 = vunpack.c.l.b16 %v1247
          %v1265 = vunpack.c.h.b16 %v1247
          %v1266 = vunpack.c.l.b16 %v1248
          %v1267 = vunpack.c.h.b16 %v1248
          %v1268 = vunpack.c.l.b16 %v1249
          %v1269 = vunpack.c.h.b16 %v1249
          %v1270 = vunpack.c.l.b16 %v1250
          %v1271 = vunpack.c.h.b16 %v1250
          %v1272 = vunpack.c.l.b16 %v1251
          %v1273 = vunpack.c.h.b16 %v1251
          %v1274 = vunpack.c.l.b16 %v1252
          %v1275 = vunpack.c.h.b16 %v1252
          %v1276 = vunpack.c.l.b16 %v1253
          %v1277 = vunpack.c.h.b16 %v1253
          %v1278 = vpack.c.b16 %v1262, %v1262
          %v1279 = vpack.c.b16 %v1263, %v1263
          %v1280 = vpack.c.b16 %v1264, %v1264
          %v1281 = vpack.c.b16 %v1265, %v1265
          %v1282 = vpack.c.b16 %v1266, %v1266
          %v1283 = vpack.c.b16 %v1267, %v1267
          %v1284 = vpack.c.b16 %v1268, %v1268
          %v1285 = vpack.c.b16 %v1269, %v1269
          %v1286 = vpack.c.b16 %v1270, %v1270
          %v1287 = vpack.c.b16 %v1271, %v1271
          %v1288 = vpack.c.b16 %v1272, %v1272
          %v1289 = vpack.c.b16 %v1273, %v1273
          %v1290 = vpack.c.b16 %v1274, %v1274
          %v1291 = vpack.c.b16 %v1275, %v1275
          %v1292 = vpack.c.b16 %v1276, %v1276
          %v1293 = vpack.c.b16 %v1277, %v1277
          %1310 = vst [vmem:[%s404] sm:$0xf] %v1278
          %1311 = vst [vmem:[%s404 + $0x4] sm:$0xf] %v1279
          %1312 = vst [vmem:[%s404 + $0x8] sm:$0xf] %v1280
          %1313 = vst [vmem:[%s404 + $0xc] sm:$0xf] %v1281
          %1314 = vst [vmem:[%s404 + $0x10] sm:$0xf] %v1282
          %1315 = vst [vmem:[%s404 + $0x14] sm:$0xf] %v1283
          %1316 = vst [vmem:[%s404 + $0x18] sm:$0xf] %v1284
          %1317 = vst [vmem:[%s404 + $0x1c] sm:$0xf] %v1285
          %1318 = vst [vmem:[%s404 + $0x20] sm:$0xf] %v1286
          %1319 = vst [vmem:[%s404 + $0x24] sm:$0xf] %v1287
          %1320 = vst [vmem:[%s404 + $0x28] sm:$0xf] %v1288
          %1321 = vst [vmem:[%s404 + $0x2c] sm:$0xf] %v1289
          %1322 = vst [vmem:[%s404 + $0x30] sm:$0xf] %v1290
          %1323 = vst [vmem:[%s404 + $0x34] sm:$0xf] %v1291
          %1324 = vst [vmem:[%s404 + $0x38] sm:$0xf] %v1292
          %1325 = vst [vmem:[%s404 + $0x3c] sm:$0xf] %v1293
        $region60: #{tpu_custom_call.1} parent=43 // pred_fallthru
          _
        %s1326 = sand.u32 %s217, 1
        %s1327 = scalar_lea.sflag [#allocation5], %s1326
        %s1328 = sand.u32 %s217, 1
        %s1329 = smul.addr %s1328, 64
        %s1330 = scalar_lea.vmem [#allocation8], %s1329
        // Predicated region
        $region61: #{tpu_custom_call.1} parent=43 // pred_check
          %p1331 = pneg %p227
        $region62: #{tpu_custom_call.1} parent=43 // pred_check_branch
          %1333 = sbr.rel (%p1331) target = $region64
        $region63: #{tpu_custom_call.1} parent=43 // pred_region
          %s1334 = smul.u32 16, %s32
          %s1336 = ssub.s32 1024, 1024
          %1337 = vsyncadd %s1327, %s1336
          %s1338 = smul.addr %s31, 16
          %s1339 = sadd.s32 %s1334, %s1338
          %s1340 = smul.addr %s1339, 64
          %s1341 = scalar_lea.hbm %s6, %s1340
          %s1342 = sshll.u32 %s1330, 4
          %s1343 = int_to_ptr.vmem [resolvable:$true] %s1342
          %1348 = dma.vmem_to_hbm [thread:$0]  %s1343, 1024, %s1341, %s1327, 64, 64, 4
        $region64: #{tpu_custom_call.1} parent=43 // pred_fallthru
          _
      $region44: #{tpu_custom_call.1} parent=5 // pred_fallthru
        _
      %p1349 = scmp.le.s32.totalorder 2, %s21
      // Predicated region
      $region65: #{tpu_custom_call.1} parent=5 // pred_check
        %p1350 = pneg %p1349
      $region66: #{tpu_custom_call.1} parent=5 // pred_check_branch
        %1352 = sbr.rel (%p1350) target = $region68
      $region67: #{tpu_custom_call.1} parent=5 // pred_region
        %s1353 = ssub.s32 %s21, 2
        // Predicated region
        $region69: #{tpu_custom_call.1} parent=67 // pred_check
          %p1354 = pneg %p233
        $region70: #{tpu_custom_call.1} parent=67 // pred_check_branch
          %1356 = sbr.rel (%p1354) target = $region72
        $region71: #{tpu_custom_call.1} parent=67 // pred_region
          %s1357 = sand.u32 %s218, 1
          %s1358 = scalar_lea.sflag [#allocation5], %s1357
          %s1359 = sand.u32 %s218, 1
          %s1360 = smul.addr %s1359, 64
          %s1361 = scalar_lea.vmem [#allocation8], %s1360
          %1362 = dma.done %s1358, 1024
        $region72: #{tpu_custom_call.1} parent=67 // pred_fallthru
          _
      $region68: #{tpu_custom_call.1} parent=5 // pred_fallthru
        _
    $region6: #{tpu_custom_call.1} parent=1 // loop_footer
      %s25 = sadd.s32 1, %s21
    $region7: #{tpu_custom_call.1} parent=1 // loop_footer_branch
      %20 = sbr.rel target = $region3
    $region8: #{tpu_custom_call.1} parent=1 // loop_exit
      _
    %1363 = vsyncpa [#allocation4], 1
    %s1364 = scalar_lea.sflag [#allocation4], 1
    %1365 = vsyncpa %s1364, 1
    %1366 = vsyncpa [#allocation7], 1
    %s1367 = scalar_lea.sflag [#allocation7], 1
    %1368 = vsyncpa %s1367, 1
    %1369 = vsyncpa [#allocation5], 1
    %s1370 = scalar_lea.sflag [#allocation5], 1
    %1371 = vsyncpa %s1370, 1

</llo_original>
